<compile_context>
chip_gen: v5e
topology: v5e:2x2
jax: 0.10.0
libtpu: 0.0.40
codegen_flags: <defaults>
</compile_context>

<pallas_src>
import functools

import jax
import jax.numpy as jnp
from jax.experimental import pallas as pl
from jax.experimental.pallas import tpu as pltpu

_LANE = 128
_SUBLANE = 8


def _round_up(n, m):
    return ((n + m - 1) // m) * m


def _softplus_stable(x):
    # single-exp numerically stable softplus: max(x, 0) + log1p(exp(-|x|))
    return jnp.maximum(x, 0.0) + jnp.log1p(jnp.exp(-jnp.abs(x)))


def _pick_tile_t(T, max_tile=1024):
    """Row-tile size along the target axis.

    Big tiles amortize the ~0.35 us per-grid-step overhead; 1024 rows of
    (x_dim + out_p) lanes is still only a few hundred KB of double-buffered
    VMEM.  On v7x (64 MiB VMEM/TC) re-derive the budget if width is large.
    """
    if T <= max_tile:
        return T
    best = None
    for t in range(_SUBLANE, max_tile + 1, _SUBLANE):
        if T % t == 0:
            best = t
    # Ragged fallback: Pallas masks the partial last tile's stores.
    return best if best is not None else max_tile


def decoder_mlp_kernel(output_dim, r_proj_ref, x_ref, w0x_ref, *rest):
    """rest = (W1, b1, ..., W_{L-1}, b_{L-1}, out_ref).

    r_proj_ref : (1, width_p) f32        r_c @ W0[:r_dim] + b0 for this batch row
    x_ref      : (TILE_T, x_dim) bf16    target-x tile (streamed)
    w0x_ref    : (x_dim, width_p) bf16   W0[r_dim:], zero-padded columns
    out_ref    : (TILE_T, out_p) f32     packed [mu | sigma | 0-pad], lane-dense
    """
    out_ref = rest[-1]
    wb_refs = rest[:-1]
    n_rest = len(wb_refs) // 2

    # Layer 0: only the x_dim-wide slice of W0; the r_c contribution and the
    # bias were folded into r_proj (per batch row) in the wrapper.
    h = jnp.dot(x_ref[...], w0x_ref[...], preferred_element_type=jnp.float32)
    h = h + r_proj_ref[...]                      # (1, width_p) broadcast, f32

    # ReLU -> Linear; bf16 MXU operands with f32 accumulation, f32 bias add.
    for i in range(n_rest):
        w = wb_refs[2 * i][...]
        b = wb_refs[2 * i + 1][...]              # (1, d_out) f32
        h = jnp.maximum(h, 0.0)
        h = jnp.dot(h.astype(w.dtype), w, preferred_element_type=jnp.float32) + b

    # h = [mu | log_sigma | zero-pad].  Apply the sigma transform only on the
    # log_sigma lanes via an iota mask -> single dense (unmasked) store.
    col = jax.lax.broadcasted_iota(jnp.int32, h.shape, 1)
    sigma = 0.1 + 0.9 * _softplus_stable(h)
    is_sigma = jnp.logical_and(col >= output_dim, col < 2 * output_dim)
    out_ref[...] = jnp.where(is_sigma, sigma, h)


def decoder_forward(r_c, tgt_x, params, output_dim, *,
                    matmul_dtype=jnp.bfloat16, tile_t=None):
    """Row-tiled Pallas Decoder forward.

    r_c:    (B, r_dim) f32
    tgt_x:  (B, T, x_dim) f32
    params: list of (W, b), W: (d_in, d_out), b: (d_out,); layer 0 has
            d_in = r_dim + x_dim.
    returns mu, sigma, each (B, T, output_dim) f32
    """
    B, T, x_dim = tgt_x.shape
    r_dim = r_c.shape[-1]
    n_layers = len(params)
    W0, b0 = params[0]
    width = W0.shape[1]
    f32 = jnp.float32

    # MXU / lane friendly padded dims (zero padding is mathematically exact).
    width_p = _round_up(width, _LANE)
    out_width = 2 * output_dim
    out_p = _round_up(max(out_width, _LANE), _LANE)   # lane-dense packed output

    # ---- layer-0 split: per-batch r_c contribution, computed once (tiny) ----
    r_proj = r_c.astype(f32) @ W0[:r_dim].astype(f32) + b0.astype(f32)[None, :]
    r_proj = jnp.pad(r_proj, ((0, 0), (0, width_p - width))).reshape(B, 1, width_p)
    w0x = jnp.pad(W0[r_dim:].astype(f32),
                  ((0, 0), (0, width_p - width))).astype(matmul_dtype)
    x = tgt_x.astype(matmul_dtype)                    # streamed bf16 activation

    # ---- remaining layers, zero-padded to (width_p, width_p / out_p) ----
    flat_params = []
    padded_dims = []
    for li, (W, b) in enumerate(params[1:], start=1):
        d_out = out_p if li == n_layers - 1 else width_p
        Wp = jnp.pad(W.astype(f32),
                     ((0, width_p - W.shape[0]), (0, d_out - W.shape[1])))
        bp = jnp.pad(b.astype(f32), (0, d_out - b.shape[0])).reshape(1, d_out)
        flat_params.append(Wp.astype(matmul_dtype))   # bf16 MXU operand
        flat_params.append(bp)                        # f32 bias
        padded_dims.append((width_p, d_out))

    TILE_T = tile_t or _pick_tile_t(T)
    n_t = pl.cdiv(T, TILE_T)
    grid = (B, n_t)

    def build_in_specs(single_buffer_weights):
        const_kw = (dict(pipeline_mode=pl.Buffered(1))
                    if single_buffer_weights else {})
        specs = [
            # per-batch r_proj row (changes with b only): default buffering
            pl.BlockSpec((None, 1, width_p), lambda b, t: (b, 0, 0)),
            # streamed target-x tile
            pl.BlockSpec((None, TILE_T, x_dim), lambda b, t: (b, t, 0)),
            # constant-index, VMEM-resident layer-0 weight slice
            pl.BlockSpec((x_dim, width_p), lambda b, t: (0, 0), **const_kw),
        ]
        for (k_d, n_d) in padded_dims:
            specs.append(pl.BlockSpec((k_d, n_d), lambda b, t: (0, 0), **const_kw))
            specs.append(pl.BlockSpec((1, n_d), lambda b, t: (0, 0), **const_kw))
        return specs

    out_spec = pl.BlockSpec((None, TILE_T, out_p), lambda b, t: (b, t, 0))
    out_shape = jax.ShapeDtypeStruct((B, T, out_p), jnp.float32)

    # ---- VMEM budget: resident weights + double-buffered streamed tiles ----
    mm_isz = x.dtype.itemsize
    resident = (int(w0x.size) * mm_isz
                + sum(int(a.size) * a.dtype.itemsize for a in flat_params)
                + 2 * width_p * 4)                                  # r_proj blocks
    streamed = 2 * TILE_T * (x_dim * mm_isz + out_p * 4)            # x + out tiles
    working = 4 * TILE_T * max(width_p, out_p) * 4                  # f32 hidden tiles
    vmem_bytes = int(min(64 << 20, max(16 << 20, 2 * (resident + streamed + working))))

    # ---- advisory cost estimate for XLA's scheduler ----
    N = B * T
    flops = 2 * N * (x_dim * width_p + sum(k * n for k, n in padded_dims))
    transcendentals = 2 * N * out_p                                 # exp + log1p
    bytes_accessed = (int(x.size) * mm_isz + int(r_proj.size) * 4
                      + int(w0x.size) * mm_isz
                      + sum(int(a.size) * a.dtype.itemsize for a in flat_params)
                      + N * out_p * 4)

    kernel = functools.partial(decoder_mlp_kernel, output_dim)
    cparams = pltpu.CompilerParams(
        dimension_semantics=("parallel", "parallel"),
        vmem_limit_bytes=vmem_bytes)
    cost = pl.CostEstimate(flops=int(flops),
                           bytes_accessed=int(bytes_accessed),
                           transcendentals=int(transcendentals))

    def run(single_buffer_weights):
        return pl.pallas_call(
            kernel,
            out_shape=out_shape,
            grid=grid,
            in_specs=build_in_specs(single_buffer_weights),
            out_specs=out_spec,
            compiler_params=cparams,
            cost_estimate=cost,
        )(r_proj, x, w0x, *flat_params)

    try:
        out = run(single_buffer_weights=True)
    except Exception:
        # Fallback for jax versions where Buffered(1) on constant-index
        # specs is not supported (default double-buffering is still correct).
        out = run(single_buffer_weights=False)

    mu = out[..., :output_dim]
    sigma = out[..., output_dim:out_width]
    return mu, sigma


def init_decoder_params(key, input_dim, output_dim, layers, width):
    """Deterministic init matching torch.nn.Linear default (+-1/sqrt(fan_in)).

    make_MLP(n_layers=layers) has exactly `layers` Linear modules:
      Linear(input_dim, width), (layers-2)x Linear(width, width),
      Linear(width, 2*output_dim).
    """
    dims = [input_dim] + [width] * (layers - 1) + [2 * output_dim]
    params = []
    for i in range(layers):
        d_in, d_out = dims[i], dims[i + 1]
        key, kw, kb = jax.random.split(key, 3)
        bound = 1.0 / jnp.sqrt(float(d_in))
        W = jax.random.uniform(kw, (d_in, d_out), jnp.float32, -bound, bound)
        b = jax.random.uniform(kb, (d_out,), jnp.float32, -bound, bound)
        params.append((W, b))
    return params


def reference_forward(r_c, tgt_x, params, output_dim):
    """Plain-JAX f32 reference (mirrors the torch module)."""
    B, T, _ = tgt_x.shape
    r_dim = r_c.shape[-1]
    h = jnp.concatenate(
        [jnp.broadcast_to(r_c[:, None, :], (B, T, r_dim)), tgt_x], axis=-1
    )
    for i, (W, b) in enumerate(params):
        if i > 0:
            h = jnp.maximum(h, 0.0)
        h = h @ W + b
    mu = h[..., :output_dim]
    log_sigma = h[..., output_dim:]
    sigma = 0.1 + 0.9 * jax.nn.softplus(log_sigma)
    return mu, sigma


if __name__ == "__main__":
    # small shapes consistent with the module's forward
    B, T = 2, 8           # batch, num target points
    r_dim, x_dim = 32, 2  # context representation dim, target x dim
    input_dim = r_dim + x_dim
    output_dim = 2
    layers = 4
    width = 32

    key = jax.random.PRNGKey(0)
    key, k_r, k_x = jax.random.split(key, 3)
    r_c = jax.random.normal(k_r, (B, r_dim), jnp.float32)
    tgt_x = jax.random.normal(k_x, (B, T, x_dim), jnp.float32)

    params = init_decoder_params(key, input_dim, output_dim, layers, width)

    mu, sigma = decoder_forward(r_c, tgt_x, params, output_dim)
    jax.block_until_ready((mu, sigma))

    mu_ref, sigma_ref = reference_forward(r_c, tgt_x, params, output_dim)
    assert mu.shape == (B, T, output_dim) and sigma.shape == (B, T, output_dim)
    # bf16 matmul operands (f32 accumulation) vs pure-f32 reference -> loose tol.
    assert jnp.allclose(mu, mu_ref, atol=3e-2, rtol=3e-2), (
        float(jnp.max(jnp.abs(mu - mu_ref))))
    assert jnp.allclose(sigma, sigma_ref, atol=3e-2, rtol=3e-2), (
        float(jnp.max(jnp.abs(sigma - sigma_ref))))
    assert bool(jnp.all(sigma > 0.1))

    print("KERNEL_OK")
</pallas_src>

<mosaic_0001>
module attributes {stable_mosaic.version = 11 : i64} {
  func.func @decoder_mlp_kernel(%arg0: i32, %arg1: i32, %arg2: memref<1x1x128xf32, #tpu.memory_space<vmem>>, %arg3: memref<1x8x2xbf16, #tpu.memory_space<vmem>>, %arg4: memref<2x128xbf16, #tpu.memory_space<vmem>>, %arg5: memref<128x128xbf16, #tpu.memory_space<vmem>>, %arg6: memref<1x128xf32, #tpu.memory_space<vmem>>, %arg7: memref<128x128xbf16, #tpu.memory_space<vmem>>, %arg8: memref<1x128xf32, #tpu.memory_space<vmem>>, %arg9: memref<128x128xbf16, #tpu.memory_space<vmem>>, %arg10: memref<1x128xf32, #tpu.memory_space<vmem>>, %arg11: memref<1x8x128xf32, #tpu.memory_space<vmem>>) attributes {dimension_semantics = [#tpu.dimension_semantics<parallel>, #tpu.dimension_semantics<parallel>], iteration_bounds = array<i64: 2, 1>, scalar_prefetch = 0 : i64, scratch_operands = 0 : i64, tpu.core_type = #tpu.core_type<tc>, window_params = [{transform_indices = @transform_0, window_bounds = array<i64: 1, 1, 128>}, {transform_indices = @transform_1, window_bounds = array<i64: 1, 8, 2>}, {pipeline_mode = #tpu.pipeline_mode<synchronous>, transform_indices = @transform_2, window_bounds = array<i64: 2, 128>}, {pipeline_mode = #tpu.pipeline_mode<synchronous>, transform_indices = @transform_3, window_bounds = array<i64: 128, 128>}, {pipeline_mode = #tpu.pipeline_mode<synchronous>, transform_indices = @transform_4, window_bounds = array<i64: 1, 128>}, {pipeline_mode = #tpu.pipeline_mode<synchronous>, transform_indices = @transform_5, window_bounds = array<i64: 128, 128>}, {pipeline_mode = #tpu.pipeline_mode<synchronous>, transform_indices = @transform_6, window_bounds = array<i64: 1, 128>}, {pipeline_mode = #tpu.pipeline_mode<synchronous>, transform_indices = @transform_7, window_bounds = array<i64: 128, 128>}, {pipeline_mode = #tpu.pipeline_mode<synchronous>, transform_indices = @transform_8, window_bounds = array<i64: 1, 128>}, {transform_indices = @transform_9, window_bounds = array<i64: 1, 8, 128>}]} {
    %c0 = arith.constant 0 : index
    %c0_0 = arith.constant 0 : index
    %c0_1 = arith.constant 0 : index
    %0 = vector.load %arg3[%c0, %c0_0, %c0_1] : memref<1x8x2xbf16, #tpu.memory_space<vmem>>, vector<1x8x2xbf16>
    %1 = vector.shape_cast %0 : vector<1x8x2xbf16> to vector<8x2xbf16>
    %c0_2 = arith.constant 0 : index
    %c0_3 = arith.constant 0 : index
    %2 = vector.load %arg4[%c0_2, %c0_3] : memref<2x128xbf16, #tpu.memory_space<vmem>>, vector<2x128xbf16>
    %cst = arith.constant dense<0.000000e+00> : vector<8x128xf32>
    %3 = tpu.matmul %1, %2, %cst {dimension_numbers = #tpu.dot_dimension_numbers<[1], [0], [0], [1], [0, 0, 1, 1], [], []>} : vector<8x2xbf16>, vector<2x128xbf16>, vector<8x128xf32> -> vector<8x128xf32>
    %c0_4 = arith.constant 0 : index
    %c0_5 = arith.constant 0 : index
    %c0_6 = arith.constant 0 : index
    %4 = vector.load %arg2[%c0_4, %c0_5, %c0_6] : memref<1x1x128xf32, #tpu.memory_space<vmem>>, vector<1x1x128xf32>
    %5 = vector.shape_cast %4 : vector<1x1x128xf32> to vector<1x128xf32>
    %6 = vector.broadcast %5 : vector<1x128xf32> to vector<8x128xf32>
    %7 = arith.addf %3, %6 : vector<8x128xf32>
    %c0_7 = arith.constant 0 : index
    %c0_8 = arith.constant 0 : index
    %8 = vector.load %arg5[%c0_7, %c0_8] : memref<128x128xbf16, #tpu.memory_space<vmem>>, vector<128x128xbf16>
    %c0_9 = arith.constant 0 : index
    %c0_10 = arith.constant 0 : index
    %9 = vector.load %arg6[%c0_9, %c0_10] : memref<1x128xf32, #tpu.memory_space<vmem>>, vector<1x128xf32>
    %cst_11 = arith.constant 0.000000e+00 : f32
    %10 = vector.broadcast %cst_11 : f32 to vector<8x128xf32>
    %11 = arith.maximumf %7, %10 : vector<8x128xf32>
    %12 = arith.truncf %11 : vector<8x128xf32> to vector<8x128xbf16>
    %cst_12 = arith.constant dense<0.000000e+00> : vector<8x128xf32>
    %13 = tpu.matmul %12, %8, %cst_12 {dimension_numbers = #tpu.dot_dimension_numbers<[1], [0], [0], [1], [0, 0, 1, 1], [], []>} : vector<8x128xbf16>, vector<128x128xbf16>, vector<8x128xf32> -> vector<8x128xf32>
    %14 = vector.broadcast %9 : vector<1x128xf32> to vector<8x128xf32>
    %15 = arith.addf %13, %14 : vector<8x128xf32>
    %c0_13 = arith.constant 0 : index
    %c0_14 = arith.constant 0 : index
    %16 = vector.load %arg7[%c0_13, %c0_14] : memref<128x128xbf16, #tpu.memory_space<vmem>>, vector<128x128xbf16>
    %c0_15 = arith.constant 0 : index
    %c0_16 = arith.constant 0 : index
    %17 = vector.load %arg8[%c0_15, %c0_16] : memref<1x128xf32, #tpu.memory_space<vmem>>, vector<1x128xf32>
    %cst_17 = arith.constant 0.000000e+00 : f32
    %18 = vector.broadcast %cst_17 : f32 to vector<8x128xf32>
    %19 = arith.maximumf %15, %18 : vector<8x128xf32>
    %20 = arith.truncf %19 : vector<8x128xf32> to vector<8x128xbf16>
    %cst_18 = arith.constant dense<0.000000e+00> : vector<8x128xf32>
    %21 = tpu.matmul %20, %16, %cst_18 {dimension_numbers = #tpu.dot_dimension_numbers<[1], [0], [0], [1], [0, 0, 1, 1], [], []>} : vector<8x128xbf16>, vector<128x128xbf16>, vector<8x128xf32> -> vector<8x128xf32>
    %22 = vector.broadcast %17 : vector<1x128xf32> to vector<8x128xf32>
    %23 = arith.addf %21, %22 : vector<8x128xf32>
    %c0_19 = arith.constant 0 : index
    %c0_20 = arith.constant 0 : index
    %24 = vector.load %arg9[%c0_19, %c0_20] : memref<128x128xbf16, #tpu.memory_space<vmem>>, vector<128x128xbf16>
    %c0_21 = arith.constant 0 : index
    %c0_22 = arith.constant 0 : index
    %25 = vector.load %arg10[%c0_21, %c0_22] : memref<1x128xf32, #tpu.memory_space<vmem>>, vector<1x128xf32>
    %cst_23 = arith.constant 0.000000e+00 : f32
    %26 = vector.broadcast %cst_23 : f32 to vector<8x128xf32>
    %27 = arith.maximumf %23, %26 : vector<8x128xf32>
    %28 = arith.truncf %27 : vector<8x128xf32> to vector<8x128xbf16>
    %cst_24 = arith.constant dense<0.000000e+00> : vector<8x128xf32>
    %29 = tpu.matmul %28, %24, %cst_24 {dimension_numbers = #tpu.dot_dimension_numbers<[1], [0], [0], [1], [0, 0, 1, 1], [], []>} : vector<8x128xbf16>, vector<128x128xbf16>, vector<8x128xf32> -> vector<8x128xf32>
    %30 = vector.broadcast %25 : vector<1x128xf32> to vector<8x128xf32>
    %31 = arith.addf %29, %30 : vector<8x128xf32>
    %32 = tpu.iota {dimensions = array<i32: 1>} : vector<8x128xi32>
    %cst_25 = arith.constant 0.000000e+00 : f32
    %33 = vector.broadcast %cst_25 : f32 to vector<8x128xf32>
    %34 = arith.maximumf %31, %33 : vector<8x128xf32>
    %35 = math.absf %31 : vector<8x128xf32>
    %cst_26 = arith.constant 0.000000e+00 : f32
    %36 = vector.broadcast %cst_26 : f32 to vector<8x128xf32>
    %37 = arith.subf %36, %35 : vector<8x128xf32>
    %38 = math.exp %37 : vector<8x128xf32>
    %39 = math.log1p %38 : vector<8x128xf32>
    %40 = arith.addf %34, %39 : vector<8x128xf32>
    %cst_27 = arith.constant 0.899999976 : f32
    %41 = vector.broadcast %cst_27 : f32 to vector<8x128xf32>
    %42 = arith.mulf %41, %40 : vector<8x128xf32>
    %cst_28 = arith.constant 1.000000e-01 : f32
    %43 = vector.broadcast %cst_28 : f32 to vector<8x128xf32>
    %44 = arith.addf %43, %42 : vector<8x128xf32>
    %c2_i32 = arith.constant 2 : i32
    %45 = vector.broadcast %c2_i32 : i32 to vector<8x128xi32>
    %46 = arith.cmpi sge, %32, %45 : vector<8x128xi32>
    %c4_i32 = arith.constant 4 : i32
    %47 = vector.broadcast %c4_i32 : i32 to vector<8x128xi32>
    %48 = arith.cmpi slt, %32, %47 : vector<8x128xi32>
    %49 = arith.andi %46, %48 : vector<8x128xi1>
    %50 = arith.select %49, %44, %31 : vector<8x128xi1>, vector<8x128xf32>
    %c0_29 = arith.constant 0 : index
    %c0_30 = arith.constant 0 : index
    %c0_31 = arith.constant 0 : index
    %51 = vector.load %arg11[%c0_29, %c0_30, %c0_31] : memref<1x8x128xf32, #tpu.memory_space<vmem>>, vector<1x8x128xf32>
    %52 = vector.shape_cast %51 : vector<1x8x128xf32> to vector<8x128xf32>
    %53 = vector.shape_cast %50 : vector<8x128xf32> to vector<1x8x128xf32>
    tpu.vector_store %arg11[%c0_29, %c0_30, %c0_31], %53 {strides = array<i32>} : memref<1x8x128xf32, #tpu.memory_space<vmem>>, vector<1x8x128xf32>,
    return
  }
  func.func @transform_0(%arg0: i32, %arg1: i32) -> (i32, i32, i32) {
    %c0_i32 = arith.constant 0 : i32
    %c0_i32_0 = arith.constant 0 : i32
    %c0_i32_1 = arith.constant 0 : i32
    return %arg0, %c0_i32, %c0_i32_0 : i32, i32, i32
  }
  func.func @transform_1(%arg0: i32, %arg1: i32) -> (i32, i32, i32) {
    %c0_i32 = arith.constant 0 : i32
    %c0_i32_0 = arith.constant 0 : i32
    return %arg0, %arg1, %c0_i32 : i32, i32, i32
  }
  func.func @transform_2(%arg0: i32, %arg1: i32) -> (i32, i32) {
    %c0_i32 = arith.constant 0 : i32
    %c0_i32_0 = arith.constant 0 : i32
    %c0_i32_1 = arith.constant 0 : i32
    return %c0_i32, %c0_i32_0 : i32, i32
  }
  func.func @transform_3(%arg0: i32, %arg1: i32) -> (i32, i32) {
    %c0_i32 = arith.constant 0 : i32
    %c0_i32_0 = arith.constant 0 : i32
    %c0_i32_1 = arith.constant 0 : i32
    return %c0_i32, %c0_i32_0 : i32, i32
  }
  func.func @transform_4(%arg0: i32, %arg1: i32) -> (i32, i32) {
    %c0_i32 = arith.constant 0 : i32
    %c0_i32_0 = arith.constant 0 : i32
    %c0_i32_1 = arith.constant 0 : i32
    return %c0_i32, %c0_i32_0 : i32, i32
  }
  func.func @transform_5(%arg0: i32, %arg1: i32) -> (i32, i32) {
    %c0_i32 = arith.constant 0 : i32
    %c0_i32_0 = arith.constant 0 : i32
    %c0_i32_1 = arith.constant 0 : i32
    return %c0_i32, %c0_i32_0 : i32, i32
  }
  func.func @transform_6(%arg0: i32, %arg1: i32) -> (i32, i32) {
    %c0_i32 = arith.constant 0 : i32
    %c0_i32_0 = arith.constant 0 : i32
    %c0_i32_1 = arith.constant 0 : i32
    return %c0_i32, %c0_i32_0 : i32, i32
  }
  func.func @transform_7(%arg0: i32, %arg1: i32) -> (i32, i32) {
    %c0_i32 = arith.constant 0 : i32
    %c0_i32_0 = arith.constant 0 : i32
    %c0_i32_1 = arith.constant 0 : i32
    return %c0_i32, %c0_i32_0 : i32, i32
  }
  func.func @transform_8(%arg0: i32, %arg1: i32) -> (i32, i32) {
    %c0_i32 = arith.constant 0 : i32
    %c0_i32_0 = arith.constant 0 : i32
    %c0_i32_1 = arith.constant 0 : i32
    return %c0_i32, %c0_i32_0 : i32, i32
  }
  func.func @transform_9(%arg0: i32, %arg1: i32) -> (i32, i32, i32) {
    %c0_i32 = arith.constant 0 : i32
    %c0_i32_0 = arith.constant 0 : i32
    return %arg0, %arg1, %c0_i32 : i32, i32, i32
  }
}

module attributes {stable_mosaic.version = 11 : i64} {
  func.func @decoder_mlp_kernel(%arg0: i32, %arg1: i32, %arg2: memref<1x1x128xf32, #tpu.memory_space<vmem>>, %arg3: memref<1x8x2xbf16, #tpu.memory_space<vmem>>, %arg4: memref<2x128xbf16, #tpu.memory_space<vmem>>, %arg5: memref<128x128xbf16, #tpu.memory_space<vmem>>, %arg6: memref<1x128xf32, #tpu.memory_space<vmem>>, %arg7: memref<128x128xbf16, #tpu.memory_space<vmem>>, %arg8: memref<1x128xf32, #tpu.memory_space<vmem>>, %arg9: memref<128x128xbf16, #tpu.memory_space<vmem>>, %arg10: memref<1x128xf32, #tpu.memory_space<vmem>>, %arg11: memref<1x8x128xf32, #tpu.memory_space<vmem>>) attributes {dimension_semantics = [#tpu.dimension_semantics<parallel>, #tpu.dimension_semantics<parallel>], iteration_bounds = array<i64: 2, 1>, scalar_prefetch = 0 : i64, scratch_operands = 0 : i64, tpu.core_type = #tpu.core_type<tc>, window_params = [{transform_indices = @transform_0, window_bounds = array<i64: 1, 1, 128>}, {transform_indices = @transform_1, window_bounds = array<i64: 1, 8, 2>}, {pipeline_mode = #tpu.pipeline_mode<synchronous>, transform_indices = @transform_2, window_bounds = array<i64: 2, 128>}, {pipeline_mode = #tpu.pipeline_mode<synchronous>, transform_indices = @transform_3, window_bounds = array<i64: 128, 128>}, {pipeline_mode = #tpu.pipeline_mode<synchronous>, transform_indices = @transform_4, window_bounds = array<i64: 1, 128>}, {pipeline_mode = #tpu.pipeline_mode<synchronous>, transform_indices = @transform_5, window_bounds = array<i64: 128, 128>}, {pipeline_mode = #tpu.pipeline_mode<synchronous>, transform_indices = @transform_6, window_bounds = array<i64: 1, 128>}, {pipeline_mode = #tpu.pipeline_mode<synchronous>, transform_indices = @transform_7, window_bounds = array<i64: 128, 128>}, {pipeline_mode = #tpu.pipeline_mode<synchronous>, transform_indices = @transform_8, window_bounds = array<i64: 1, 128>}, {transform_indices = @transform_9, window_bounds = array<i64: 1, 8, 128>}]} {
    %c0 = arith.constant 0 : index
    %c0_0 = arith.constant 0 : index
    %c0_1 = arith.constant 0 : index
    %0 = vector.load %arg3[%c0, %c0_0, %c0_1] : memref<1x8x2xbf16, #tpu.memory_space<vmem>>, vector<1x8x2xbf16>
    %1 = vector.shape_cast %0 : vector<1x8x2xbf16> to vector<8x2xbf16>
    %c0_2 = arith.constant 0 : index
    %c0_3 = arith.constant 0 : index
    %2 = vector.load %arg4[%c0_2, %c0_3] : memref<2x128xbf16, #tpu.memory_space<vmem>>, vector<2x128xbf16>
    %cst = arith.constant dense<0.000000e+00> : vector<8x128xf32>
    %3 = tpu.matmul %1, %2, %cst {dimension_numbers = #tpu.dot_dimension_numbers<[1], [0], [0], [1], [0, 0, 1, 1], [], []>} : vector<8x2xbf16>, vector<2x128xbf16>, vector<8x128xf32> -> vector<8x128xf32>
    %c0_4 = arith.constant 0 : index
    %c0_5 = arith.constant 0 : index
    %c0_6 = arith.constant 0 : index
    %4 = vector.load %arg2[%c0_4, %c0_5, %c0_6] : memref<1x1x128xf32, #tpu.memory_space<vmem>>, vector<1x1x128xf32>
    %5 = vector.shape_cast %4 : vector<1x1x128xf32> to vector<1x128xf32>
    %6 = vector.broadcast %5 : vector<1x128xf32> to vector<8x128xf32>
    %7 = arith.addf %3, %6 : vector<8x128xf32>
    %c0_7 = arith.constant 0 : index
    %c0_8 = arith.constant 0 : index
    %8 = vector.load %arg5[%c0_7, %c0_8] : memref<128x128xbf16, #tpu.memory_space<vmem>>, vector<128x128xbf16>
    %c0_9 = arith.constant 0 : index
    %c0_10 = arith.constant 0 : index
    %9 = vector.load %arg6[%c0_9, %c0_10] : memref<1x128xf32, #tpu.memory_space<vmem>>, vector<1x128xf32>
    %cst_11 = arith.constant 0.000000e+00 : f32
    %10 = vector.broadcast %cst_11 : f32 to vector<8x128xf32>
    %11 = arith.maximumf %7, %10 : vector<8x128xf32>
    %12 = arith.truncf %11 : vector<8x128xf32> to vector<8x128xbf16>
    %cst_12 = arith.constant dense<0.000000e+00> : vector<8x128xf32>
    %13 = tpu.matmul %12, %8, %cst_12 {dimension_numbers = #tpu.dot_dimension_numbers<[1], [0], [0], [1], [0, 0, 1, 1], [], []>} : vector<8x128xbf16>, vector<128x128xbf16>, vector<8x128xf32> -> vector<8x128xf32>
    %14 = vector.broadcast %9 : vector<1x128xf32> to vector<8x128xf32>
    %15 = arith.addf %13, %14 : vector<8x128xf32>
    %c0_13 = arith.constant 0 : index
    %c0_14 = arith.constant 0 : index
    %16 = vector.load %arg7[%c0_13, %c0_14] : memref<128x128xbf16, #tpu.memory_space<vmem>>, vector<128x128xbf16>
    %c0_15 = arith.constant 0 : index
    %c0_16 = arith.constant 0 : index
    %17 = vector.load %arg8[%c0_15, %c0_16] : memref<1x128xf32, #tpu.memory_space<vmem>>, vector<1x128xf32>
    %cst_17 = arith.constant 0.000000e+00 : f32
    %18 = vector.broadcast %cst_17 : f32 to vector<8x128xf32>
    %19 = arith.maximumf %15, %18 : vector<8x128xf32>
    %20 = arith.truncf %19 : vector<8x128xf32> to vector<8x128xbf16>
    %cst_18 = arith.constant dense<0.000000e+00> : vector<8x128xf32>
    %21 = tpu.matmul %20, %16, %cst_18 {dimension_numbers = #tpu.dot_dimension_numbers<[1], [0], [0], [1], [0, 0, 1, 1], [], []>} : vector<8x128xbf16>, vector<128x128xbf16>, vector<8x128xf32> -> vector<8x128xf32>
    %22 = vector.broadcast %17 : vector<1x128xf32> to vector<8x128xf32>
    %23 = arith.addf %21, %22 : vector<8x128xf32>
    %c0_19 = arith.constant 0 : index
    %c0_20 = arith.constant 0 : index
    %24 = vector.load %arg9[%c0_19, %c0_20] : memref<128x128xbf16, #tpu.memory_space<vmem>>, vector<128x128xbf16>
    %c0_21 = arith.constant 0 : index
    %c0_22 = arith.constant 0 : index
    %25 = vector.load %arg10[%c0_21, %c0_22] : memref<1x128xf32, #tpu.memory_space<vmem>>, vector<1x128xf32>
    %cst_23 = arith.constant 0.000000e+00 : f32
    %26 = vector.broadcast %cst_23 : f32 to vector<8x128xf32>
    %27 = arith.maximumf %23, %26 : vector<8x128xf32>
    %28 = arith.truncf %27 : vector<8x128xf32> to vector<8x128xbf16>
    %cst_24 = arith.constant dense<0.000000e+00> : vector<8x128xf32>
    %29 = tpu.matmul %28, %24, %cst_24 {dimension_numbers = #tpu.dot_dimension_numbers<[1], [0], [0], [1], [0, 0, 1, 1], [], []>} : vector<8x128xbf16>, vector<128x128xbf16>, vector<8x128xf32> -> vector<8x128xf32>
    %30 = vector.broadcast %25 : vector<1x128xf32> to vector<8x128xf32>
    %31 = arith.addf %29, %30 : vector<8x128xf32>
    %32 = tpu.iota {dimensions = array<i32: 1>} : vector<8x128xi32>
    %cst_25 = arith.constant 0.000000e+00 : f32
    %33 = vector.broadcast %cst_25 : f32 to vector<8x128xf32>
    %34 = arith.maximumf %31, %33 : vector<8x128xf32>
    %35 = math.absf %31 : vector<8x128xf32>
    %cst_26 = arith.constant 0.000000e+00 : f32
    %36 = vector.broadcast %cst_26 : f32 to vector<8x128xf32>
    %37 = arith.subf %36, %35 : vector<8x128xf32>
    %38 = math.exp %37 : vector<8x128xf32>
    %39 = math.log1p %38 : vector<8x128xf32>
    %40 = arith.addf %34, %39 : vector<8x128xf32>
    %cst_27 = arith.constant 0.899999976 : f32
    %41 = vector.broadcast %cst_27 : f32 to vector<8x128xf32>
    %42 = arith.mulf %41, %40 : vector<8x128xf32>
    %cst_28 = arith.constant 1.000000e-01 : f32
    %43 = vector.broadcast %cst_28 : f32 to vector<8x128xf32>
    %44 = arith.addf %43, %42 : vector<8x128xf32>
    %c2_i32 = arith.constant 2 : i32
    %45 = vector.broadcast %c2_i32 : i32 to vector<8x128xi32>
    %46 = arith.cmpi sge, %32, %45 : vector<8x128xi32>
    %c4_i32 = arith.constant 4 : i32
    %47 = vector.broadcast %c4_i32 : i32 to vector<8x128xi32>
    %48 = arith.cmpi slt, %32, %47 : vector<8x128xi32>
    %49 = arith.andi %46, %48 : vector<8x128xi1>
    %50 = arith.select %49, %44, %31 : vector<8x128xi1>, vector<8x128xf32>
    %c0_29 = arith.constant 0 : index
    %c0_30 = arith.constant 0 : index
    %c0_31 = arith.constant 0 : index
    %51 = vector.load %arg11[%c0_29, %c0_30, %c0_31] : memref<1x8x128xf32, #tpu.memory_space<vmem>>, vector<1x8x128xf32>
    %52 = vector.shape_cast %51 : vector<1x8x128xf32> to vector<8x128xf32>
    %53 = vector.shape_cast %50 : vector<8x128xf32> to vector<1x8x128xf32>
    tpu.vector_store %arg11[%c0_29, %c0_30, %c0_31], %53 {strides = array<i32>} : memref<1x8x128xf32, #tpu.memory_space<vmem>>, vector<1x8x128xf32>,
    return
  }
  func.func @transform_0(%arg0: i32, %arg1: i32) -> (i32, i32, i32) {
    %c0_i32 = arith.constant 0 : i32
    %c0_i32_0 = arith.constant 0 : i32
    %c0_i32_1 = arith.constant 0 : i32
    return %arg0, %c0_i32, %c0_i32_0 : i32, i32, i32
  }
  func.func @transform_1(%arg0: i32, %arg1: i32) -> (i32, i32, i32) {
    %c0_i32 = arith.constant 0 : i32
    %c0_i32_0 = arith.constant 0 : i32
    return %arg0, %arg1, %c0_i32 : i32, i32, i32
  }
  func.func @transform_2(%arg0: i32, %arg1: i32) -> (i32, i32) {
    %c0_i32 = arith.constant 0 : i32
    %c0_i32_0 = arith.constant 0 : i32
    %c0_i32_1 = arith.constant 0 : i32
    return %c0_i32, %c0_i32_0 : i32, i32
  }
  func.func @transform_3(%arg0: i32, %arg1: i32) -> (i32, i32) {
    %c0_i32 = arith.constant 0 : i32
    %c0_i32_0 = arith.constant 0 : i32
    %c0_i32_1 = arith.constant 0 : i32
    return %c0_i32, %c0_i32_0 : i32, i32
  }
  func.func @transform_4(%arg0: i32, %arg1: i32) -> (i32, i32) {
    %c0_i32 = arith.constant 0 : i32
    %c0_i32_0 = arith.constant 0 : i32
    %c0_i32_1 = arith.constant 0 : i32
    return %c0_i32, %c0_i32_0 : i32, i32
  }
  func.func @transform_5(%arg0: i32, %arg1: i32) -> (i32, i32) {
    %c0_i32 = arith.constant 0 : i32
    %c0_i32_0 = arith.constant 0 : i32
    %c0_i32_1 = arith.constant 0 : i32
    return %c0_i32, %c0_i32_0 : i32, i32
  }
  func.func @transform_6(%arg0: i32, %arg1: i32) -> (i32, i32) {
    %c0_i32 = arith.constant 0 : i32
    %c0_i32_0 = arith.constant 0 : i32
    %c0_i32_1 = arith.constant 0 : i32
    return %c0_i32, %c0_i32_0 : i32, i32
  }
  func.func @transform_7(%arg0: i32, %arg1: i32) -> (i32, i32) {
    %c0_i32 = arith.constant 0 : i32
    %c0_i32_0 = arith.constant 0 : i32
    %c0_i32_1 = arith.constant 0 : i32
    return %c0_i32, %c0_i32_0 : i32, i32
  }
  func.func @transform_8(%arg0: i32, %arg1: i32) -> (i32, i32) {
    %c0_i32 = arith.constant 0 : i32
    %c0_i32_0 = arith.constant 0 : i32
    %c0_i32_1 = arith.constant 0 : i32
    return %c0_i32, %c0_i32_0 : i32, i32
  }
  func.func @transform_9(%arg0: i32, %arg1: i32) -> (i32, i32, i32) {
    %c0_i32 = arith.constant 0 : i32
    %c0_i32_0 = arith.constant 0 : i32
    return %arg0, %arg1, %c0_i32 : i32, i32, i32
  }
}

</mosaic_0001>

<llo_original>
// kernel: tpu_custom_call.1
$region0: #{tpu_custom_call.1}
  #allocation0 [shape = 'u32[]', space=smem, size = 0x4, offset = 0x4, fixed_abs, tag = 'smem constant byte address 0x4 - core index']
  #allocation1 [shape = 'u32[72,128]{1,0:T(1,128)}', space=vmem, size = 0x9000, scoped, tag = 'internal scratch']
  %s0 = inlined_call_operand.vmem [shape: f32[2,1,128], index: 0, kind: input, shape index: {}]
  %s1 = inlined_call_operand.vmem [shape: bf16[2,8,2], index: 1, kind: input, shape index: {}]
  %s2 = inlined_call_operand.vmem [shape: bf16[2,128], index: 2, kind: input, shape index: {}]
  %s3 = inlined_call_operand.hbm [shape: bf16[128,128], index: 3, kind: input, shape index: {}]
  %s4 = inlined_call_operand.vmem [shape: f32[1,128], index: 4, kind: input, shape index: {}]
  %s5 = inlined_call_operand.hbm [shape: bf16[128,128], index: 5, kind: input, shape index: {}]
  %s6 = inlined_call_operand.vmem [shape: f32[1,128], index: 6, kind: input, shape index: {}]
  %s7 = inlined_call_operand.hbm [shape: bf16[128,128], index: 7, kind: input, shape index: {}]
  %s8 = inlined_call_operand.vmem [shape: f32[1,128], index: 8, kind: input, shape index: {}]
  %s9 = inlined_call_operand.hbm [shape: f32[2,8,128], index: 9, kind: output, shape index: {}]
  %s10 = sld [smem:[#allocation0]]
  $region81: #{tpu_custom_call.1} parent=0
    _
  %s12 = ssub.s32 1, %s10
  %s13 = scalar_select 0, %s12, %s10
  $region1: #{tpu_custom_call.1} parent=0
    #allocation2 [shape = 'u8[32768]{0}', space=vmem, size = 0x8000, scoped, tag = 'input window, operand 3, single buffered']
    #allocation3 [shape = 's32[2]{0}', space=sflag, size = 0x8, scoped, tag = 'scoped memory for tpu_custom_call.1']
    #allocation4 [shape = 's32[2]{0}', space=sflag, size = 0x8, scoped, tag = 'scoped memory for tpu_custom_call.1']
    #allocation5 [shape = 'u8[32768]{0}', space=vmem, size = 0x8000, scoped, tag = 'input window, operand 5, single buffered']
    #allocation6 [shape = 's32[1]{0}', space=sflag, size = 0x4, scoped, tag = 'scoped memory for tpu_custom_call.1']
    #allocation7 [shape = 'u8[32768]{0}', space=vmem, size = 0x8000, scoped, tag = 'input window, operand 7, single buffered']
    #allocation8 [shape = 'u8[8192]{0}', space=vmem, size = 0x2000, scoped, tag = 'output window, operand 0']
    %14 = vsyncpa [#allocation3], 0
    %15 = vsyncpa [#allocation6], 0
    %16 = vsyncpa [#allocation4], 0
    %s17 = scalar_lea.sflag [#allocation4], 1
    %18 = vsyncpa %s17, 0
    loop: start=0, step=1, limit=4
    $region2: #{tpu_custom_call.1} parent=1 // loop_pre_header
      _
    $region3: #{tpu_custom_call.1} parent=1 // loop_header
      %s20 = sphi 0, %s24
      %p21 = scmp.ge.s32.totalorder %s20, 4
      %s27 = sphi 0, %s39
      %s28 = sphi 0, %s35
      %s29 = sphi 0, %s27
      %s30 = sphi 0, %s28
      %s31 = sphi 0, %s29
      %s32 = sphi 0, %s30
      %s42 = sphi 0, %s44
      %s45 = sphi 0, %s42
      %s46 = sphi 0, %s45
      %s62 = sphi 0, %s46
      %s70 = sphi 0, %s72
      %s73 = sphi 0, %s70
      %s74 = sphi 0, %s73
      %s90 = sphi 0, %s74
      %s94 = sphi 0, %s94
      %s96 = sphi 0, %s94
      %s97 = sphi 0, %s96
      %s111 = sphi 0, %s97
      %s115 = sphi 0, %s115
      %s117 = sphi 0, %s115
      %s118 = sphi 0, %s117
      %s132 = sphi 0, %s118
      %s136 = sphi 0, %s136
      %s138 = sphi 0, %s136
      %s139 = sphi 0, %s138
      %s153 = sphi 0, %s139
      %s157 = sphi 0, %s157
      %s159 = sphi 0, %s157
      %s160 = sphi 0, %s159
      %s174 = sphi 0, %s160
      %s178 = sphi 0, %s178
      %s180 = sphi 0, %s178
      %s181 = sphi 0, %s180
      %s195 = sphi 0, %s181
      %s199 = sphi 0, %s199
      %s201 = sphi 0, %s199
      %s202 = sphi 0, %s201
      %s216 = sphi 0, %s202
      %s220 = sphi 0, %s220
      %s222 = sphi 0, %s220
      %s223 = sphi 0, %s222
      %s237 = sphi 0, %s223
      %s245 = sphi 0, %s247
      %s248 = sphi 0, %s245
      %s249 = sphi 0, %s248
      %s265 = sphi 0, %s249
    $region4: #{tpu_custom_call.1} parent=1 // loop_header_branch
      %23 = sbr.rel (%p21) target = $region8
    $region5: #{tpu_custom_call.1} parent=1 // loop_body
      %s25 = ssub.s32 %s20, 1
      %s26 = ssub.s32 %s20, 2
      %s33 = sadd.s32 1, %s28
      %p34 = scmp.ge.s32.totalorder %s33, 1
      %s35 = scalar_select %p34, 0, %s33
      %s36 = sadd.s32 1, %s27
      %s37 = scalar_select %p34, %s36, %s27
      %p38 = scmp.ge.s32.totalorder %s37, 2
      %s39 = scalar_select %p38, 0, %s37
      %s40 = ssub.s32 %s27, %s39
      %p41 = scmp.eq.s32.totalorder %s40, 0
      %s43 = sadd.s32 %s42, 1
      %s44 = scalar_select %p41, %s42, %s43
      %p47 = pneg %p41
      %p48 = scmp.eq.s32.totalorder %s20, 1
      %p49 = por %p47, %p48
      %p50 = scmp.ne.s32.totalorder %s42, %s45
      %p51 = scmp.eq.s32.totalorder %s20, 0
      %p52 = por %p50, %p51
      %p53 = scmp.ne.s32.totalorder %s42, %s45
      %p54 = scmp.eq.s32.totalorder %s25, 1
      %p55 = por %p53, %p54
      %p56 = scmp.ne.s32.totalorder %s45, %s46
      %p57 = scmp.eq.s32.totalorder %s25, 0
      %p58 = por %p56, %p57
      %p59 = scmp.ne.s32.totalorder %s45, %s46
      %p60 = scmp.eq.s32.totalorder %s26, 1
      %p61 = por %p59, %p60
      %p63 = scmp.ne.s32.totalorder %s46, %s62
      %p64 = scmp.eq.s32.totalorder %s26, 0
      %p65 = por %p63, %p64
      %s66 = ssub.s32 %s27, %s39
      %s67 = ssub.s32 %s28, %s35
      %s68 = sor.u32 %s66, %s67
      %p69 = scmp.eq.s32.totalorder %s68, 0
      %s71 = sadd.s32 %s70, 1
      %s72 = scalar_select %p69, %s70, %s71
      %p75 = pneg %p69
      %p76 = scmp.eq.s32.totalorder %s20, 1
      %p77 = por %p75, %p76
      %p78 = scmp.ne.s32.totalorder %s70, %s73
      %p79 = scmp.eq.s32.totalorder %s20, 0
      %p80 = por %p78, %p79
      %p81 = scmp.ne.s32.totalorder %s70, %s73
      %p82 = scmp.eq.s32.totalorder %s25, 1
      %p83 = por %p81, %p82
      %p84 = scmp.ne.s32.totalorder %s73, %s74
      %p85 = scmp.eq.s32.totalorder %s25, 0
      %p86 = por %p84, %p85
      %p87 = scmp.ne.s32.totalorder %s73, %s74
      %p88 = scmp.eq.s32.totalorder %s26, 1
      %p89 = por %p87, %p88
      %p91 = scmp.ne.s32.totalorder %s74, %s90
      %p92 = scmp.eq.s32.totalorder %s26, 0
      %p93 = por %p91, %p92
      %s95 = sadd.s32 %s94, 1
      %p98 = scmp.eq.s32.totalorder %s20, 1
      %p99 = scmp.ne.s32.totalorder %s94, %s96
      %p100 = scmp.eq.s32.totalorder %s20, 0
      %p101 = por %p99, %p100
      %p102 = scmp.ne.s32.totalorder %s94, %s96
      %p103 = scmp.eq.s32.totalorder %s25, 1
      %p104 = por %p102, %p103
      %p105 = scmp.ne.s32.totalorder %s96, %s97
      %p106 = scmp.eq.s32.totalorder %s25, 0
      %p107 = por %p105, %p106
      %p108 = scmp.ne.s32.totalorder %s96, %s97
      %p109 = scmp.eq.s32.totalorder %s26, 1
      %p110 = por %p108, %p109
      %p112 = scmp.ne.s32.totalorder %s97, %s111
      %p113 = scmp.eq.s32.totalorder %s26, 0
      %p114 = por %p112, %p113
      %s116 = sadd.s32 %s115, 1
      %p119 = scmp.eq.s32.totalorder %s20, 1
      %p120 = scmp.ne.s32.totalorder %s115, %s117
      %p121 = scmp.eq.s32.totalorder %s20, 0
      %p122 = por %p120, %p121
      %p123 = scmp.ne.s32.totalorder %s115, %s117
      %p124 = scmp.eq.s32.totalorder %s25, 1
      %p125 = por %p123, %p124
      %p126 = scmp.ne.s32.totalorder %s117, %s118
      %p127 = scmp.eq.s32.totalorder %s25, 0
      %p128 = por %p126, %p127
      %p129 = scmp.ne.s32.totalorder %s117, %s118
      %p130 = scmp.eq.s32.totalorder %s26, 1
      %p131 = por %p129, %p130
      %p133 = scmp.ne.s32.totalorder %s118, %s132
      %p134 = scmp.eq.s32.totalorder %s26, 0
      %p135 = por %p133, %p134
      %s137 = sadd.s32 %s136, 1
      %p140 = scmp.eq.s32.totalorder %s20, 1
      %p141 = scmp.ne.s32.totalorder %s136, %s138
      %p142 = scmp.eq.s32.totalorder %s20, 0
      %p143 = por %p141, %p142
      %p144 = scmp.ne.s32.totalorder %s136, %s138
      %p145 = scmp.eq.s32.totalorder %s25, 1
      %p146 = por %p144, %p145
      %p147 = scmp.ne.s32.totalorder %s138, %s139
      %p148 = scmp.eq.s32.totalorder %s25, 0
      %p149 = por %p147, %p148
      %p150 = scmp.ne.s32.totalorder %s138, %s139
      %p151 = scmp.eq.s32.totalorder %s26, 1
      %p152 = por %p150, %p151
      %p154 = scmp.ne.s32.totalorder %s139, %s153
      %p155 = scmp.eq.s32.totalorder %s26, 0
      %p156 = por %p154, %p155
      %s158 = sadd.s32 %s157, 1
      %p161 = scmp.eq.s32.totalorder %s20, 1
      %p162 = scmp.ne.s32.totalorder %s157, %s159
      %p163 = scmp.eq.s32.totalorder %s20, 0
      %p164 = por %p162, %p163
      %p165 = scmp.ne.s32.totalorder %s157, %s159
      %p166 = scmp.eq.s32.totalorder %s25, 1
      %p167 = por %p165, %p166
      %p168 = scmp.ne.s32.totalorder %s159, %s160
      %p169 = scmp.eq.s32.totalorder %s25, 0
      %p170 = por %p168, %p169
      %p171 = scmp.ne.s32.totalorder %s159, %s160
      %p172 = scmp.eq.s32.totalorder %s26, 1
      %p173 = por %p171, %p172
      %p175 = scmp.ne.s32.totalorder %s160, %s174
      %p176 = scmp.eq.s32.totalorder %s26, 0
      %p177 = por %p175, %p176
      %s179 = sadd.s32 %s178, 1
      %p182 = scmp.eq.s32.totalorder %s20, 1
      %p183 = scmp.ne.s32.totalorder %s178, %s180
      %p184 = scmp.eq.s32.totalorder %s20, 0
      %p185 = por %p183, %p184
      %p186 = scmp.ne.s32.totalorder %s178, %s180
      %p187 = scmp.eq.s32.totalorder %s25, 1
      %p188 = por %p186, %p187
      %p189 = scmp.ne.s32.totalorder %s180, %s181
      %p190 = scmp.eq.s32.totalorder %s25, 0
      %p191 = por %p189, %p190
      %p192 = scmp.ne.s32.totalorder %s180, %s181
      %p193 = scmp.eq.s32.totalorder %s26, 1
      %p194 = por %p192, %p193
      %p196 = scmp.ne.s32.totalorder %s181, %s195
      %p197 = scmp.eq.s32.totalorder %s26, 0
      %p198 = por %p196, %p197
      %s200 = sadd.s32 %s199, 1
      %p203 = scmp.eq.s32.totalorder %s20, 1
      %p204 = scmp.ne.s32.totalorder %s199, %s201
      %p205 = scmp.eq.s32.totalorder %s20, 0
      %p206 = por %p204, %p205
      %p207 = scmp.ne.s32.totalorder %s199, %s201
      %p208 = scmp.eq.s32.totalorder %s25, 1
      %p209 = por %p207, %p208
      %p210 = scmp.ne.s32.totalorder %s201, %s202
      %p211 = scmp.eq.s32.totalorder %s25, 0
      %p212 = por %p210, %p211
      %p213 = scmp.ne.s32.totalorder %s201, %s202
      %p214 = scmp.eq.s32.totalorder %s26, 1
      %p215 = por %p213, %p214
      %p217 = scmp.ne.s32.totalorder %s202, %s216
      %p218 = scmp.eq.s32.totalorder %s26, 0
      %p219 = por %p217, %p218
      %s221 = sadd.s32 %s220, 1
      %p224 = scmp.eq.s32.totalorder %s20, 1
      %p225 = scmp.ne.s32.totalorder %s220, %s222
      %p226 = scmp.eq.s32.totalorder %s20, 0
      %p227 = por %p225, %p226
      %p228 = scmp.ne.s32.totalorder %s220, %s222
      %p229 = scmp.eq.s32.totalorder %s25, 1
      %p230 = por %p228, %p229
      %p231 = scmp.ne.s32.totalorder %s222, %s223
      %p232 = scmp.eq.s32.totalorder %s25, 0
      %p233 = por %p231, %p232
      %p234 = scmp.ne.s32.totalorder %s222, %s223
      %p235 = scmp.eq.s32.totalorder %s26, 1
      %p236 = por %p234, %p235
      %p238 = scmp.ne.s32.totalorder %s223, %s237
      %p239 = scmp.eq.s32.totalorder %s26, 0
      %p240 = por %p238, %p239
      %s241 = ssub.s32 %s27, %s39
      %s242 = ssub.s32 %s28, %s35
      %s243 = sor.u32 %s241, %s242
      %p244 = scmp.eq.s32.totalorder %s243, 0
      %s246 = sadd.s32 %s245, 1
      %s247 = scalar_select %p244, %s245, %s246
      %p250 = pneg %p244
      %p251 = scmp.eq.s32.totalorder %s20, 1
      %p252 = por %p250, %p251
      %p253 = scmp.ne.s32.totalorder %s245, %s248
      %p254 = scmp.eq.s32.totalorder %s20, 0
      %p255 = por %p253, %p254
      %p256 = scmp.ne.s32.totalorder %s245, %s248
      %p257 = scmp.eq.s32.totalorder %s25, 1
      %p258 = por %p256, %p257
      %p259 = scmp.ne.s32.totalorder %s248, %s249
      %p260 = scmp.eq.s32.totalorder %s25, 0
      %p261 = por %p259, %p260
      %p262 = scmp.ne.s32.totalorder %s248, %s249
      %p263 = scmp.eq.s32.totalorder %s26, 1
      %p264 = por %p262, %p263
      %p266 = scmp.ne.s32.totalorder %s249, %s265
      %p267 = scmp.eq.s32.totalorder %s26, 0
      %p268 = por %p266, %p267
      %p269 = scmp.le.s32.totalorder 1, %s20
      %p270 = scmp.lt.s32.totalorder %s20, 3
      %p271 = pnand %p269, %p270
      %p272 = pneg %p271
      // Predicated region
      $region9: #{tpu_custom_call.1} parent=5 // pred_check
        _
      $region10: #{tpu_custom_call.1} parent=5 // pred_check_branch
        %274 = sbr.rel (%p271) target = $region12
      $region11: #{tpu_custom_call.1} parent=5 // pred_region
        %s275 = ssub.s32 %s20, 1
        // Predicated region
        $region13: #{tpu_custom_call.1} parent=11 // pred_check
          %p276 = pneg %p107
        $region14: #{tpu_custom_call.1} parent=11 // pred_check_branch
          %278 = sbr.rel (%p276) target = $region16
        $region15: #{tpu_custom_call.1} parent=11 // pred_region
          _
        $region16: #{tpu_custom_call.1} parent=11 // pred_fallthru
          _
        // Predicated region
        $region17: #{tpu_custom_call.1} parent=11 // pred_check
          %p279 = pneg %p128
        $region18: #{tpu_custom_call.1} parent=11 // pred_check_branch
          %281 = sbr.rel (%p279) target = $region20
        $region19: #{tpu_custom_call.1} parent=11 // pred_region
          %283 = vsyncadd [#allocation3], 0
          %s284 = sshll.u32 %s3, 4
          %s285 = int_to_ptr.hbm [resolvable:$true] %s284
          %s286 = sshll.u32 [#allocation2], 4
          %s287 = int_to_ptr.vmem [resolvable:$true] %s286
          %292 = dma.hbm_to_vmem [thread:$0]  %s285, 1024, %s287, [#allocation3], 64, 64, 4
        $region20: #{tpu_custom_call.1} parent=11 // pred_fallthru
          _
        // Predicated region
        $region21: #{tpu_custom_call.1} parent=11 // pred_check
          %p293 = pneg %p149
        $region22: #{tpu_custom_call.1} parent=11 // pred_check_branch
          %295 = sbr.rel (%p293) target = $region24
        $region23: #{tpu_custom_call.1} parent=11 // pred_region
          _
        $region24: #{tpu_custom_call.1} parent=11 // pred_fallthru
          _
        // Predicated region
        $region25: #{tpu_custom_call.1} parent=11 // pred_check
          %p296 = pneg %p170
        $region26: #{tpu_custom_call.1} parent=11 // pred_check_branch
          %298 = sbr.rel (%p296) target = $region28
        $region27: #{tpu_custom_call.1} parent=11 // pred_region
          %300 = vsyncadd [#allocation6], 0
          %s301 = sshll.u32 %s5, 4
          %s302 = int_to_ptr.hbm [resolvable:$true] %s301
          %s303 = sshll.u32 [#allocation5], 4
          %s304 = int_to_ptr.vmem [resolvable:$true] %s303
          %309 = dma.hbm_to_vmem [thread:$0]  %s302, 1024, %s304, [#allocation6], 64, 64, 4
        $region28: #{tpu_custom_call.1} parent=11 // pred_fallthru
          _
        // Predicated region
        $region29: #{tpu_custom_call.1} parent=11 // pred_check
          %p310 = pneg %p191
        $region30: #{tpu_custom_call.1} parent=11 // pred_check_branch
          %312 = sbr.rel (%p310) target = $region32
        $region31: #{tpu_custom_call.1} parent=11 // pred_region
          _
        $region32: #{tpu_custom_call.1} parent=11 // pred_fallthru
          _
        // Predicated region
        $region33: #{tpu_custom_call.1} parent=11 // pred_check
          %p313 = pneg %p212
        $region34: #{tpu_custom_call.1} parent=11 // pred_check_branch
          %315 = sbr.rel (%p313) target = $region36
        $region35: #{tpu_custom_call.1} parent=11 // pred_region
          %317 = vsyncadd [#allocation6], 0
          %s318 = sshll.u32 %s7, 4
          %s319 = int_to_ptr.hbm [resolvable:$true] %s318
          %s320 = sshll.u32 [#allocation7], 4
          %s321 = int_to_ptr.vmem [resolvable:$true] %s320
          %326 = dma.hbm_to_vmem [thread:$0]  %s319, 1024, %s321, [#allocation6], 64, 64, 4
        $region36: #{tpu_custom_call.1} parent=11 // pred_fallthru
          _
        // Predicated region
        $region37: #{tpu_custom_call.1} parent=11 // pred_check
          %p327 = pneg %p233
        $region38: #{tpu_custom_call.1} parent=11 // pred_check_branch
          %329 = sbr.rel (%p327) target = $region40
        $region39: #{tpu_custom_call.1} parent=11 // pred_region
          _
        $region40: #{tpu_custom_call.1} parent=11 // pred_fallthru
          _
      $region12: #{tpu_custom_call.1} parent=5 // pred_fallthru
        _
      %p330 = scmp.lt.s32.totalorder %s20, 2
      // Predicated region
      $region41: #{tpu_custom_call.1} parent=5 // pred_check
        %p331 = pneg %p330
      $region42: #{tpu_custom_call.1} parent=5 // pred_check_branch
        %333 = sbr.rel (%p331) target = $region44
      $region43: #{tpu_custom_call.1} parent=5 // pred_region
        // Predicated region
        $region45: #{tpu_custom_call.1} parent=43 // pred_check
          %p334 = pneg %p52
        $region46: #{tpu_custom_call.1} parent=43 // pred_check_branch
          %336 = sbr.rel (%p334) target = $region48
        $region47: #{tpu_custom_call.1} parent=43 // pred_region
          %p337 = scmp.lt.s32.totalorder %s27, 1
          %s338 = scalar_select %p337, %s27, 1
          %s339 = scalar_lea.vmem %s0, %s338
        $region48: #{tpu_custom_call.1} parent=43 // pred_fallthru
          _
        // Predicated region
        $region49: #{tpu_custom_call.1} parent=43 // pred_check
          %p340 = pneg %p80
        $region50: #{tpu_custom_call.1} parent=43 // pred_check_branch
          %342 = sbr.rel (%p340) target = $region52
        $region51: #{tpu_custom_call.1} parent=43 // pred_region
          %p343 = scmp.lt.s32.totalorder %s27, 1
          %s344 = scalar_select %p343, %s27, 1
          %p345 = scmp.lt.s32.totalorder %s28, 0
          %s346 = scalar_select %p345, %s28, 0
          %s347 = sadd.s32 %s346, %s344
          %s348 = smul.addr %s347, 4
          %s349 = scalar_lea.vmem %s1, %s348
        $region52: #{tpu_custom_call.1} parent=43 // pred_fallthru
          _
      $region44: #{tpu_custom_call.1} parent=5 // pred_fallthru
        _
      %p350 = scmp.le.s32.totalorder 1, %s20
      %p351 = scmp.lt.s32.totalorder %s20, 3
      %p352 = pnand %p350, %p351
      %p353 = pneg %p352
      // Predicated region
      $region53: #{tpu_custom_call.1} parent=5 // pred_check
        _
      $region54: #{tpu_custom_call.1} parent=5 // pred_check_branch
        %355 = sbr.rel (%p352) target = $region56
      $region55: #{tpu_custom_call.1} parent=5 // pred_region
        %s356 = ssub.s32 %s20, 1
        // Predicated region
        $region57: #{tpu_custom_call.1} parent=55 // pred_check
          %p357 = pneg %p128
        $region58: #{tpu_custom_call.1} parent=55 // pred_check_branch
          %359 = sbr.rel (%p357) target = $region60
        $region59: #{tpu_custom_call.1} parent=55 // pred_region
          %361 = dma.done [#allocation3], 1024
        $region60: #{tpu_custom_call.1} parent=55 // pred_fallthru
          _
        // Predicated region
        $region61: #{tpu_custom_call.1} parent=55 // pred_check
          %p362 = pneg %p170
        $region62: #{tpu_custom_call.1} parent=55 // pred_check_branch
          %364 = sbr.rel (%p362) target = $region64
        $region63: #{tpu_custom_call.1} parent=55 // pred_region
          %366 = dma.done [#allocation6], 1024
        $region64: #{tpu_custom_call.1} parent=55 // pred_fallthru
          _
        // Predicated region
        $region65: #{tpu_custom_call.1} parent=55 // pred_check
          %p367 = pneg %p212
        $region66: #{tpu_custom_call.1} parent=55 // pred_check_branch
          %369 = sbr.rel (%p367) target = $region68
        $region67: #{tpu_custom_call.1} parent=55 // pred_region
          %371 = dma.done [#allocation6], 1024
        $region68: #{tpu_custom_call.1} parent=55 // pred_fallthru
          _
        %p372 = scmp.lt.s32.totalorder %s29, 1
        %s373 = scalar_select %p372, %s29, 1
        %s374 = scalar_lea.vmem %s0, %s373
        %p375 = pneg %p58
        %p376 = pneg %p55
        %p377 = scmp.lt.s32.totalorder %s29, 1
        %s378 = scalar_select %p377, %s29, 1
        %p379 = scmp.lt.s32.totalorder %s30, 0
        %s380 = scalar_select %p379, %s30, 0
        %s381 = sadd.s32 %s380, %s378
        %s382 = smul.addr %s381, 4
        %s383 = scalar_lea.vmem %s1, %s382
        %p384 = pneg %p86
        %p385 = pneg %p83
        %p386 = pneg %p107
        %p387 = pneg %p104
        %p388 = pneg %p128
        %p389 = pneg %p125
        %p390 = pneg %p149
        %p391 = pneg %p146
        %p392 = pneg %p170
        %p393 = pneg %p167
        %p394 = pneg %p191
        %p395 = pneg %p188
        %p396 = pneg %p212
        %p397 = pneg %p209
        %p398 = pneg %p233
        %p399 = pneg %p230
        %p400 = pneg %p261
        %p401 = pneg %p258
        %s402 = sand.u32 %s248, 1
        %s403 = scalar_lea.sflag [#allocation4], %s402
        %s404 = sand.u32 %s248, 1
        %s405 = smul.addr %s404, 8
        %s406 = scalar_lea.vmem [#allocation8], %s405
        %p407 = scmp.lt.s32.totalorder %s29, 1
        %s408 = scalar_select %p407, %s29, 1
        %s409 = scalar_lea.vmem %s0, %s408
        %p410 = scmp.lt.s32.totalorder %s29, 1
        %s411 = scalar_select %p410, %s29, 1
        %p412 = scmp.lt.s32.totalorder %s30, 0
        %s413 = scalar_select %p412, %s30, 0
        %s414 = sadd.s32 %s413, %s411
        %s415 = smul.addr %s414, 4
        %s416 = scalar_lea.vmem %s1, %s415
        %v418 = vld [vmem:[%s416] sm:$0xf]
        %v419 = vld [vmem:[%s2] sm:$0x1]
        %v420 = vld [vmem:[%s409] sm:$0x1]
        %v422 = vperm.slane %v420, 0
        %vm424 = vcmask 15360
        %v426 = vsel %vm424, %v418, 0
        %vm428 = vcmask 1040384
        %v430 = vsel %vm428, %v419, 0
        %432 = vmatpush.bf16.msra.mxu0 0
        %433 = vmatpush.bf16.msra.mxu0 0
        %434 = vmatpush.bf16.msra.mxu0 0
        %435 = vmatpush.bf16.msra.mxu0 0
        %436 = vmatpush.bf16.msra.mxu0 0
        %437 = vmatpush.bf16.msra.mxu0 0
        %438 = vmatpush.bf16.msra.mxu0 0
        %439 = vmatpush.bf16.msra.mxu0 %v430
        %440 = vmatmul.bf16.gmra.mxu0 %v426
        %v441 = vpop.f32.mrf.mxu0
        %v442 = vadd.f32 %v422, %v441
        %v443 = vpop.f32.mrf.mxu0
        %444 = vdwg.mxu0
        %v445 = vld [vmem:[#allocation2] sm:$0xf]
        %v446 = vld [vmem:[#allocation2 + $0x4] sm:$0xf]
        %v447 = vld [vmem:[#allocation2 + $0x8] sm:$0xf]
        %v448 = vld [vmem:[#allocation2 + $0xc] sm:$0xf]
        %v449 = vld [vmem:[#allocation2 + $0x10] sm:$0xf]
        %v450 = vld [vmem:[#allocation2 + $0x14] sm:$0xf]
        %v451 = vld [vmem:[#allocation2 + $0x18] sm:$0xf]
        %v452 = vld [vmem:[#allocation2 + $0x1c] sm:$0xf]
        %v453 = vld [vmem:[#allocation2 + $0x20] sm:$0xf]
        %v454 = vld [vmem:[#allocation2 + $0x24] sm:$0xf]
        %v455 = vld [vmem:[#allocation2 + $0x28] sm:$0xf]
        %v456 = vld [vmem:[#allocation2 + $0x2c] sm:$0xf]
        %v457 = vld [vmem:[#allocation2 + $0x30] sm:$0xf]
        %v458 = vld [vmem:[#allocation2 + $0x34] sm:$0xf]
        %v459 = vld [vmem:[#allocation2 + $0x38] sm:$0xf]
        %v460 = vld [vmem:[#allocation2 + $0x3c] sm:$0xf]
        %v461 = vld [vmem:[%s4] sm:$0x1]
        %v462 = vmax.f32 %v442, 0.0
        %v463 = vpack.c.bf16 %v462, %v462
        %v465 = vperm.slane %v461, 0
        %v483 = vunpack.c.l.b16 %v445
        %v484 = vunpack.c.l.b16 %v446
        %v485 = vunpack.c.l.b16 %v447
        %v486 = vunpack.c.l.b16 %v448
        %v487 = vunpack.c.l.b16 %v449
        %v488 = vunpack.c.l.b16 %v450
        %v489 = vunpack.c.l.b16 %v451
        %v490 = vunpack.c.l.b16 %v452
        %v491 = vunpack.c.l.b16 %v453
        %v492 = vunpack.c.l.b16 %v454
        %v493 = vunpack.c.l.b16 %v455
        %v494 = vunpack.c.l.b16 %v456
        %v495 = vunpack.c.l.b16 %v457
        %v496 = vunpack.c.l.b16 %v458
        %v497 = vunpack.c.l.b16 %v459
        %v498 = vunpack.c.l.b16 %v460
        %v499 = vpack.c.b16 %v484, %v483
        %v500 = vpack.c.b16 %v486, %v485
        %v501 = vpack.c.b16 %v488, %v487
        %v502 = vpack.c.b16 %v490, %v489
        %v503 = vpack.c.b16 %v492, %v491
        %v504 = vpack.c.b16 %v494, %v493
        %v505 = vpack.c.b16 %v496, %v495
        %v506 = vpack.c.b16 %v498, %v497
        %515 = vmatpush.bf16.msra.mxu0 %v506
        %516 = vmatpush.bf16.msra.mxu0 %v505
        %517 = vmatpush.bf16.msra.mxu0 %v504
        %518 = vmatpush.bf16.msra.mxu0 %v503
        %519 = vmatpush.bf16.msra.mxu0 %v502
        %520 = vmatpush.bf16.msra.mxu0 %v501
        %521 = vmatpush.bf16.msra.mxu0 %v500
        %522 = vmatpush.bf16.msra.mxu0 %v499
        %523 = vmatmul.bf16.gmra.mxu0 %v463
        %v524 = vpop.f32.mrf.mxu0
        %v525 = vadd.f32 %v465, %v524
        %v526 = vpop.f32.mrf.mxu0
        %527 = vdwg.mxu0
        %v528 = vld [vmem:[#allocation5] sm:$0xf]
        %v529 = vld [vmem:[#allocation5 + $0x4] sm:$0xf]
        %v530 = vld [vmem:[#allocation5 + $0x8] sm:$0xf]
        %v531 = vld [vmem:[#allocation5 + $0xc] sm:$0xf]
        %v532 = vld [vmem:[#allocation5 + $0x10] sm:$0xf]
        %v533 = vld [vmem:[#allocation5 + $0x14] sm:$0xf]
        %v534 = vld [vmem:[#allocation5 + $0x18] sm:$0xf]
        %v535 = vld [vmem:[#allocation5 + $0x1c] sm:$0xf]
        %v536 = vld [vmem:[#allocation5 + $0x20] sm:$0xf]
        %v537 = vld [vmem:[#allocation5 + $0x24] sm:$0xf]
        %v538 = vld [vmem:[#allocation5 + $0x28] sm:$0xf]
        %v539 = vld [vmem:[#allocation5 + $0x2c] sm:$0xf]
        %v540 = vld [vmem:[#allocation5 + $0x30] sm:$0xf]
        %v541 = vld [vmem:[#allocation5 + $0x34] sm:$0xf]
        %v542 = vld [vmem:[#allocation5 + $0x38] sm:$0xf]
        %v543 = vld [vmem:[#allocation5 + $0x3c] sm:$0xf]
        %v544 = vld [vmem:[%s6] sm:$0x1]
        %v545 = vmax.f32 %v525, 0.0
        %v546 = vpack.c.bf16 %v545, %v545
        %v548 = vperm.slane %v544, 0
        %v566 = vunpack.c.l.b16 %v528
        %v567 = vunpack.c.l.b16 %v529
        %v568 = vunpack.c.l.b16 %v530
        %v569 = vunpack.c.l.b16 %v531
        %v570 = vunpack.c.l.b16 %v532
        %v571 = vunpack.c.l.b16 %v533
        %v572 = vunpack.c.l.b16 %v534
        %v573 = vunpack.c.l.b16 %v535
        %v574 = vunpack.c.l.b16 %v536
        %v575 = vunpack.c.l.b16 %v537
        %v576 = vunpack.c.l.b16 %v538
        %v577 = vunpack.c.l.b16 %v539
        %v578 = vunpack.c.l.b16 %v540
        %v579 = vunpack.c.l.b16 %v541
        %v580 = vunpack.c.l.b16 %v542
        %v581 = vunpack.c.l.b16 %v543
        %v582 = vpack.c.b16 %v567, %v566
        %v583 = vpack.c.b16 %v569, %v568
        %v584 = vpack.c.b16 %v571, %v570
        %v585 = vpack.c.b16 %v573, %v572
        %v586 = vpack.c.b16 %v575, %v574
        %v587 = vpack.c.b16 %v577, %v576
        %v588 = vpack.c.b16 %v579, %v578
        %v589 = vpack.c.b16 %v581, %v580
        %598 = vmatpush.bf16.msra.mxu0 %v589
        %599 = vmatpush.bf16.msra.mxu0 %v588
        %600 = vmatpush.bf16.msra.mxu0 %v587
        %601 = vmatpush.bf16.msra.mxu0 %v586
        %602 = vmatpush.bf16.msra.mxu0 %v585
        %603 = vmatpush.bf16.msra.mxu0 %v584
        %604 = vmatpush.bf16.msra.mxu0 %v583
        %605 = vmatpush.bf16.msra.mxu0 %v582
        %606 = vmatmul.bf16.gmra.mxu0 %v546
        %v607 = vpop.f32.mrf.mxu0
        %v608 = vadd.f32 %v548, %v607
        %v609 = vpop.f32.mrf.mxu0
        %610 = vdwg.mxu0
        %v611 = vld [vmem:[#allocation7] sm:$0xf]
        %v612 = vld [vmem:[#allocation7 + $0x4] sm:$0xf]
        %v613 = vld [vmem:[#allocation7 + $0x8] sm:$0xf]
        %v614 = vld [vmem:[#allocation7 + $0xc] sm:$0xf]
        %v615 = vld [vmem:[#allocation7 + $0x10] sm:$0xf]
        %v616 = vld [vmem:[#allocation7 + $0x14] sm:$0xf]
        %v617 = vld [vmem:[#allocation7 + $0x18] sm:$0xf]
        %v618 = vld [vmem:[#allocation7 + $0x1c] sm:$0xf]
        %v619 = vld [vmem:[#allocation7 + $0x20] sm:$0xf]
        %v620 = vld [vmem:[#allocation7 + $0x24] sm:$0xf]
        %v621 = vld [vmem:[#allocation7 + $0x28] sm:$0xf]
        %v622 = vld [vmem:[#allocation7 + $0x2c] sm:$0xf]
        %v623 = vld [vmem:[#allocation7 + $0x30] sm:$0xf]
        %v624 = vld [vmem:[#allocation7 + $0x34] sm:$0xf]
        %v625 = vld [vmem:[#allocation7 + $0x38] sm:$0xf]
        %v626 = vld [vmem:[#allocation7 + $0x3c] sm:$0xf]
        %v627 = vld [vmem:[%s8] sm:$0x1]
        %v628 = vmax.f32 %v608, 0.0
        %v629 = vpack.c.bf16 %v628, %v628
        %v631 = vperm.slane %v627, 0
        %v649 = vunpack.c.l.b16 %v611
        %v650 = vunpack.c.l.b16 %v612
        %v651 = vunpack.c.l.b16 %v613
        %v652 = vunpack.c.l.b16 %v614
        %v653 = vunpack.c.l.b16 %v615
        %v654 = vunpack.c.l.b16 %v616
        %v655 = vunpack.c.l.b16 %v617
        %v656 = vunpack.c.l.b16 %v618
        %v657 = vunpack.c.l.b16 %v619
        %v658 = vunpack.c.l.b16 %v620
        %v659 = vunpack.c.l.b16 %v621
        %v660 = vunpack.c.l.b16 %v622
        %v661 = vunpack.c.l.b16 %v623
        %v662 = vunpack.c.l.b16 %v624
        %v663 = vunpack.c.l.b16 %v625
        %v664 = vunpack.c.l.b16 %v626
        %v665 = vpack.c.b16 %v650, %v649
        %v666 = vpack.c.b16 %v652, %v651
        %v667 = vpack.c.b16 %v654, %v653
        %v668 = vpack.c.b16 %v656, %v655
        %v669 = vpack.c.b16 %v658, %v657
        %v670 = vpack.c.b16 %v660, %v659
        %v671 = vpack.c.b16 %v662, %v661
        %v672 = vpack.c.b16 %v664, %v663
        %681 = vmatpush.bf16.msra.mxu0 %v672
        %682 = vmatpush.bf16.msra.mxu0 %v671
        %683 = vmatpush.bf16.msra.mxu0 %v670
        %684 = vmatpush.bf16.msra.mxu0 %v669
        %685 = vmatpush.bf16.msra.mxu0 %v668
        %686 = vmatpush.bf16.msra.mxu0 %v667
        %687 = vmatpush.bf16.msra.mxu0 %v666
        %688 = vmatpush.bf16.msra.mxu0 %v665
        %689 = vmatmul.bf16.gmra.mxu0 %v629
        %v690 = vpop.f32.mrf.mxu0
        %v691 = vadd.f32 %v631, %v690
        %v692 = vpop.f32.mrf.mxu0
        %693 = vdwg.mxu0
        %v694 = vlaneseq
        %v695 = vand.u32 %v694, 127
        %v696 = vmax.f32 %v691, 0.0
        %v697 = vand.u32 2147483647, %v691
        %v698 = vsub.f32 0.0, %v697
        %v699 = vmul.f32 %v698, 1.442695
        %v700 = vpow.pop %v699
        %v701 = vadd.f32 %v700, 1.0
        %v702 = vlog2.pop %v701
        %v703 = vmul.f32 %v702, 0.6931472
        %v704 = vmul.f32 -0.5, %v700
        %v705 = vadd.f32 %v704, 1.0
        %v706 = vmul.f32 %v705, %v700
        %v707 = vand.u32 2147483647, %v700
        %vm708 = vcmp.lt.f32.partialorder %v707, 0.0004427343
        %v709 = vsel %vm708, %v706, %v703
        %v710 = vadd.f32 %v696, %v709
        %v711 = vmul.f32 %v710, 0.9
        %v712 = vadd.f32 %v711, 0.1
        %vm713 = vcmp.ge.s32.totalorder %v695, 2
        %vm714 = vcmp.lt.s32.totalorder %v695, 4
        %vm715 = vmand %vm713, %vm714
        %v716 = vsel %vm715, %v712, %v691
        %717 = vst [vmem:[%s406] sm:$0xff] %v716
        %s718 = sand.u32 %s248, 1
        %s719 = scalar_lea.sflag [#allocation4], %s718
        %s720 = sand.u32 %s248, 1
        %s721 = smul.addr %s720, 8
        %s722 = scalar_lea.vmem [#allocation8], %s721
        // Predicated region
        $region69: #{tpu_custom_call.1} parent=55 // pred_check
          %p723 = pneg %p258
        $region70: #{tpu_custom_call.1} parent=55 // pred_check_branch
          %725 = sbr.rel (%p723) target = $region72
        $region71: #{tpu_custom_call.1} parent=55 // pred_region
          %727 = vsyncadd %s719, 0
          %s728 = sadd.s32 %s30, %s29
          %s729 = smul.addr %s728, 8
          %s730 = scalar_lea.hbm %s9, %s729
          %s732 = sshll.u32 %s722, 4
          %s733 = int_to_ptr.vmem [resolvable:$true] %s732
          %s734 = sshll.u32 %s730, 4
          %s735 = int_to_ptr.hbm [resolvable:$true] %s734
          %737 = dma.vmem_to_hbm [thread:$0]  %s733, 128, %s735, %s719
        $region72: #{tpu_custom_call.1} parent=55 // pred_fallthru
          _
      $region56: #{tpu_custom_call.1} parent=5 // pred_fallthru
        _
      %p738 = scmp.le.s32.totalorder 2, %s20
      // Predicated region
      $region73: #{tpu_custom_call.1} parent=5 // pred_check
        %p739 = pneg %p738
      $region74: #{tpu_custom_call.1} parent=5 // pred_check_branch
        %741 = sbr.rel (%p739) target = $region76
      $region75: #{tpu_custom_call.1} parent=5 // pred_region
        %s742 = ssub.s32 %s20, 2
        // Predicated region
        $region77: #{tpu_custom_call.1} parent=75 // pred_check
          %p743 = pneg %p264
        $region78: #{tpu_custom_call.1} parent=75 // pred_check_branch
          %745 = sbr.rel (%p743) target = $region80
        $region79: #{tpu_custom_call.1} parent=75 // pred_region
          %s746 = sand.u32 %s249, 1
          %s747 = scalar_lea.sflag [#allocation4], %s746
          %s748 = sand.u32 %s249, 1
          %s749 = smul.addr %s748, 8
          %s750 = scalar_lea.vmem [#allocation8], %s749
          %752 = dma.done %s747, 128
        $region80: #{tpu_custom_call.1} parent=75 // pred_fallthru
          _
      $region76: #{tpu_custom_call.1} parent=5 // pred_fallthru
        _
    $region6: #{tpu_custom_call.1} parent=1 // loop_footer
      %s24 = sadd.s32 1, %s20
    $region7: #{tpu_custom_call.1} parent=1 // loop_footer_branch
      %19 = sbr.rel target = $region3
    $region8: #{tpu_custom_call.1} parent=1 // loop_exit
      _
    %753 = vsyncpa [#allocation3], 1
    %s754 = scalar_lea.sflag [#allocation3], 1
    %755 = vsyncpa %s754, 1
    %756 = vsyncpa [#allocation6], 1
    %757 = vsyncpa [#allocation4], 1
    %s758 = scalar_lea.sflag [#allocation4], 1
    %759 = vsyncpa %s758, 1

// kernel: tpu_custom_call.1
$region0: #{tpu_custom_call.1}
  #allocation0 [shape = 'u32[]', space=smem, size = 0x4, offset = 0x4, fixed_abs, tag = 'smem constant byte address 0x4 - core index']
  #allocation1 [shape = 'u32[72,128]{1,0:T(1,128)}', space=vmem, size = 0x9000, scoped, tag = 'internal scratch']
  %s0 = inlined_call_operand.vmem [shape: f32[2,1,128], index: 0, kind: input, shape index: {}]
  %s1 = inlined_call_operand.vmem [shape: bf16[2,8,2], index: 1, kind: input, shape index: {}]
  %s2 = inlined_call_operand.vmem [shape: bf16[2,128], index: 2, kind: input, shape index: {}]
  %s3 = inlined_call_operand.hbm [shape: bf16[128,128], index: 3, kind: input, shape index: {}]
  %s4 = inlined_call_operand.vmem [shape: f32[1,128], index: 4, kind: input, shape index: {}]
  %s5 = inlined_call_operand.hbm [shape: bf16[128,128], index: 5, kind: input, shape index: {}]
  %s6 = inlined_call_operand.vmem [shape: f32[1,128], index: 6, kind: input, shape index: {}]
  %s7 = inlined_call_operand.hbm [shape: bf16[128,128], index: 7, kind: input, shape index: {}]
  %s8 = inlined_call_operand.vmem [shape: f32[1,128], index: 8, kind: input, shape index: {}]
  %s9 = inlined_call_operand.hbm [shape: f32[2,8,128], index: 9, kind: output, shape index: {}]
  %s10 = sld [smem:[#allocation0]]
  $region81: #{tpu_custom_call.1} parent=0
    _
  %s12 = ssub.s32 1, %s10
  %s13 = scalar_select 0, %s12, %s10
  $region1: #{tpu_custom_call.1} parent=0
    #allocation2 [shape = 'u8[32768]{0}', space=vmem, size = 0x8000, scoped, tag = 'input window, operand 3, single buffered']
    #allocation3 [shape = 's32[2]{0}', space=sflag, size = 0x8, scoped, tag = 'scoped memory for tpu_custom_call.1']
    #allocation4 [shape = 's32[2]{0}', space=sflag, size = 0x8, scoped, tag = 'scoped memory for tpu_custom_call.1']
    #allocation5 [shape = 'u8[32768]{0}', space=vmem, size = 0x8000, scoped, tag = 'input window, operand 5, single buffered']
    #allocation6 [shape = 's32[1]{0}', space=sflag, size = 0x4, scoped, tag = 'scoped memory for tpu_custom_call.1']
    #allocation7 [shape = 'u8[32768]{0}', space=vmem, size = 0x8000, scoped, tag = 'input window, operand 7, single buffered']
    #allocation8 [shape = 'u8[8192]{0}', space=vmem, size = 0x2000, scoped, tag = 'output window, operand 0']
    %14 = vsyncpa [#allocation3], 0
    %15 = vsyncpa [#allocation6], 0
    %16 = vsyncpa [#allocation4], 0
    %s17 = scalar_lea.sflag [#allocation4], 1
    %18 = vsyncpa %s17, 0
    loop: start=0, step=1, limit=4
    $region2: #{tpu_custom_call.1} parent=1 // loop_pre_header
      _
    $region3: #{tpu_custom_call.1} parent=1 // loop_header
      %s20 = sphi 0, %s24
      %p21 = scmp.ge.s32.totalorder %s20, 4
      %s27 = sphi 0, %s39
      %s28 = sphi 0, %s35
      %s29 = sphi 0, %s27
      %s30 = sphi 0, %s28
      %s31 = sphi 0, %s29
      %s32 = sphi 0, %s30
      %s42 = sphi 0, %s44
      %s45 = sphi 0, %s42
      %s46 = sphi 0, %s45
      %s62 = sphi 0, %s46
      %s70 = sphi 0, %s72
      %s73 = sphi 0, %s70
      %s74 = sphi 0, %s73
      %s90 = sphi 0, %s74
      %s94 = sphi 0, %s94
      %s96 = sphi 0, %s94
      %s97 = sphi 0, %s96
      %s111 = sphi 0, %s97
      %s115 = sphi 0, %s115
      %s117 = sphi 0, %s115
      %s118 = sphi 0, %s117
      %s132 = sphi 0, %s118
      %s136 = sphi 0, %s136
      %s138 = sphi 0, %s136
      %s139 = sphi 0, %s138
      %s153 = sphi 0, %s139
      %s157 = sphi 0, %s157
      %s159 = sphi 0, %s157
      %s160 = sphi 0, %s159
      %s174 = sphi 0, %s160
      %s178 = sphi 0, %s178
      %s180 = sphi 0, %s178
      %s181 = sphi 0, %s180
      %s195 = sphi 0, %s181
      %s199 = sphi 0, %s199
      %s201 = sphi 0, %s199
      %s202 = sphi 0, %s201
      %s216 = sphi 0, %s202
      %s220 = sphi 0, %s220
      %s222 = sphi 0, %s220
      %s223 = sphi 0, %s222
      %s237 = sphi 0, %s223
      %s245 = sphi 0, %s247
      %s248 = sphi 0, %s245
      %s249 = sphi 0, %s248
      %s265 = sphi 0, %s249
    $region4: #{tpu_custom_call.1} parent=1 // loop_header_branch
      %23 = sbr.rel (%p21) target = $region8
    $region5: #{tpu_custom_call.1} parent=1 // loop_body
      %s25 = ssub.s32 %s20, 1
      %s26 = ssub.s32 %s20, 2
      %s33 = sadd.s32 1, %s28
      %p34 = scmp.ge.s32.totalorder %s33, 1
      %s35 = scalar_select %p34, 0, %s33
      %s36 = sadd.s32 1, %s27
      %s37 = scalar_select %p34, %s36, %s27
      %p38 = scmp.ge.s32.totalorder %s37, 2
      %s39 = scalar_select %p38, 0, %s37
      %s40 = ssub.s32 %s27, %s39
      %p41 = scmp.eq.s32.totalorder %s40, 0
      %s43 = sadd.s32 %s42, 1
      %s44 = scalar_select %p41, %s42, %s43
      %p47 = pneg %p41
      %p48 = scmp.eq.s32.totalorder %s20, 1
      %p49 = por %p47, %p48
      %p50 = scmp.ne.s32.totalorder %s42, %s45
      %p51 = scmp.eq.s32.totalorder %s20, 0
      %p52 = por %p50, %p51
      %p53 = scmp.ne.s32.totalorder %s42, %s45
      %p54 = scmp.eq.s32.totalorder %s25, 1
      %p55 = por %p53, %p54
      %p56 = scmp.ne.s32.totalorder %s45, %s46
      %p57 = scmp.eq.s32.totalorder %s25, 0
      %p58 = por %p56, %p57
      %p59 = scmp.ne.s32.totalorder %s45, %s46
      %p60 = scmp.eq.s32.totalorder %s26, 1
      %p61 = por %p59, %p60
      %p63 = scmp.ne.s32.totalorder %s46, %s62
      %p64 = scmp.eq.s32.totalorder %s26, 0
      %p65 = por %p63, %p64
      %s66 = ssub.s32 %s27, %s39
      %s67 = ssub.s32 %s28, %s35
      %s68 = sor.u32 %s66, %s67
      %p69 = scmp.eq.s32.totalorder %s68, 0
      %s71 = sadd.s32 %s70, 1
      %s72 = scalar_select %p69, %s70, %s71
      %p75 = pneg %p69
      %p76 = scmp.eq.s32.totalorder %s20, 1
      %p77 = por %p75, %p76
      %p78 = scmp.ne.s32.totalorder %s70, %s73
      %p79 = scmp.eq.s32.totalorder %s20, 0
      %p80 = por %p78, %p79
      %p81 = scmp.ne.s32.totalorder %s70, %s73
      %p82 = scmp.eq.s32.totalorder %s25, 1
      %p83 = por %p81, %p82
      %p84 = scmp.ne.s32.totalorder %s73, %s74
      %p85 = scmp.eq.s32.totalorder %s25, 0
      %p86 = por %p84, %p85
      %p87 = scmp.ne.s32.totalorder %s73, %s74
      %p88 = scmp.eq.s32.totalorder %s26, 1
      %p89 = por %p87, %p88
      %p91 = scmp.ne.s32.totalorder %s74, %s90
      %p92 = scmp.eq.s32.totalorder %s26, 0
      %p93 = por %p91, %p92
      %s95 = sadd.s32 %s94, 1
      %p98 = scmp.eq.s32.totalorder %s20, 1
      %p99 = scmp.ne.s32.totalorder %s94, %s96
      %p100 = scmp.eq.s32.totalorder %s20, 0
      %p101 = por %p99, %p100
      %p102 = scmp.ne.s32.totalorder %s94, %s96
      %p103 = scmp.eq.s32.totalorder %s25, 1
      %p104 = por %p102, %p103
      %p105 = scmp.ne.s32.totalorder %s96, %s97
      %p106 = scmp.eq.s32.totalorder %s25, 0
      %p107 = por %p105, %p106
      %p108 = scmp.ne.s32.totalorder %s96, %s97
      %p109 = scmp.eq.s32.totalorder %s26, 1
      %p110 = por %p108, %p109
      %p112 = scmp.ne.s32.totalorder %s97, %s111
      %p113 = scmp.eq.s32.totalorder %s26, 0
      %p114 = por %p112, %p113
      %s116 = sadd.s32 %s115, 1
      %p119 = scmp.eq.s32.totalorder %s20, 1
      %p120 = scmp.ne.s32.totalorder %s115, %s117
      %p121 = scmp.eq.s32.totalorder %s20, 0
      %p122 = por %p120, %p121
      %p123 = scmp.ne.s32.totalorder %s115, %s117
      %p124 = scmp.eq.s32.totalorder %s25, 1
      %p125 = por %p123, %p124
      %p126 = scmp.ne.s32.totalorder %s117, %s118
      %p127 = scmp.eq.s32.totalorder %s25, 0
      %p128 = por %p126, %p127
      %p129 = scmp.ne.s32.totalorder %s117, %s118
      %p130 = scmp.eq.s32.totalorder %s26, 1
      %p131 = por %p129, %p130
      %p133 = scmp.ne.s32.totalorder %s118, %s132
      %p134 = scmp.eq.s32.totalorder %s26, 0
      %p135 = por %p133, %p134
      %s137 = sadd.s32 %s136, 1
      %p140 = scmp.eq.s32.totalorder %s20, 1
      %p141 = scmp.ne.s32.totalorder %s136, %s138
      %p142 = scmp.eq.s32.totalorder %s20, 0
      %p143 = por %p141, %p142
      %p144 = scmp.ne.s32.totalorder %s136, %s138
      %p145 = scmp.eq.s32.totalorder %s25, 1
      %p146 = por %p144, %p145
      %p147 = scmp.ne.s32.totalorder %s138, %s139
      %p148 = scmp.eq.s32.totalorder %s25, 0
      %p149 = por %p147, %p148
      %p150 = scmp.ne.s32.totalorder %s138, %s139
      %p151 = scmp.eq.s32.totalorder %s26, 1
      %p152 = por %p150, %p151
      %p154 = scmp.ne.s32.totalorder %s139, %s153
      %p155 = scmp.eq.s32.totalorder %s26, 0
      %p156 = por %p154, %p155
      %s158 = sadd.s32 %s157, 1
      %p161 = scmp.eq.s32.totalorder %s20, 1
      %p162 = scmp.ne.s32.totalorder %s157, %s159
      %p163 = scmp.eq.s32.totalorder %s20, 0
      %p164 = por %p162, %p163
      %p165 = scmp.ne.s32.totalorder %s157, %s159
      %p166 = scmp.eq.s32.totalorder %s25, 1
      %p167 = por %p165, %p166
      %p168 = scmp.ne.s32.totalorder %s159, %s160
      %p169 = scmp.eq.s32.totalorder %s25, 0
      %p170 = por %p168, %p169
      %p171 = scmp.ne.s32.totalorder %s159, %s160
      %p172 = scmp.eq.s32.totalorder %s26, 1
      %p173 = por %p171, %p172
      %p175 = scmp.ne.s32.totalorder %s160, %s174
      %p176 = scmp.eq.s32.totalorder %s26, 0
      %p177 = por %p175, %p176
      %s179 = sadd.s32 %s178, 1
      %p182 = scmp.eq.s32.totalorder %s20, 1
      %p183 = scmp.ne.s32.totalorder %s178, %s180
      %p184 = scmp.eq.s32.totalorder %s20, 0
      %p185 = por %p183, %p184
      %p186 = scmp.ne.s32.totalorder %s178, %s180
      %p187 = scmp.eq.s32.totalorder %s25, 1
      %p188 = por %p186, %p187
      %p189 = scmp.ne.s32.totalorder %s180, %s181
      %p190 = scmp.eq.s32.totalorder %s25, 0
      %p191 = por %p189, %p190
      %p192 = scmp.ne.s32.totalorder %s180, %s181
      %p193 = scmp.eq.s32.totalorder %s26, 1
      %p194 = por %p192, %p193
      %p196 = scmp.ne.s32.totalorder %s181, %s195
      %p197 = scmp.eq.s32.totalorder %s26, 0
      %p198 = por %p196, %p197
      %s200 = sadd.s32 %s199, 1
      %p203 = scmp.eq.s32.totalorder %s20, 1
      %p204 = scmp.ne.s32.totalorder %s199, %s201
      %p205 = scmp.eq.s32.totalorder %s20, 0
      %p206 = por %p204, %p205
      %p207 = scmp.ne.s32.totalorder %s199, %s201
      %p208 = scmp.eq.s32.totalorder %s25, 1
      %p209 = por %p207, %p208
      %p210 = scmp.ne.s32.totalorder %s201, %s202
      %p211 = scmp.eq.s32.totalorder %s25, 0
      %p212 = por %p210, %p211
      %p213 = scmp.ne.s32.totalorder %s201, %s202
      %p214 = scmp.eq.s32.totalorder %s26, 1
      %p215 = por %p213, %p214
      %p217 = scmp.ne.s32.totalorder %s202, %s216
      %p218 = scmp.eq.s32.totalorder %s26, 0
      %p219 = por %p217, %p218
      %s221 = sadd.s32 %s220, 1
      %p224 = scmp.eq.s32.totalorder %s20, 1
      %p225 = scmp.ne.s32.totalorder %s220, %s222
      %p226 = scmp.eq.s32.totalorder %s20, 0
      %p227 = por %p225, %p226
      %p228 = scmp.ne.s32.totalorder %s220, %s222
      %p229 = scmp.eq.s32.totalorder %s25, 1
      %p230 = por %p228, %p229
      %p231 = scmp.ne.s32.totalorder %s222, %s223
      %p232 = scmp.eq.s32.totalorder %s25, 0
      %p233 = por %p231, %p232
      %p234 = scmp.ne.s32.totalorder %s222, %s223
      %p235 = scmp.eq.s32.totalorder %s26, 1
      %p236 = por %p234, %p235
      %p238 = scmp.ne.s32.totalorder %s223, %s237
      %p239 = scmp.eq.s32.totalorder %s26, 0
      %p240 = por %p238, %p239
      %s241 = ssub.s32 %s27, %s39
      %s242 = ssub.s32 %s28, %s35
      %s243 = sor.u32 %s241, %s242
      %p244 = scmp.eq.s32.totalorder %s243, 0
      %s246 = sadd.s32 %s245, 1
      %s247 = scalar_select %p244, %s245, %s246
      %p250 = pneg %p244
      %p251 = scmp.eq.s32.totalorder %s20, 1
      %p252 = por %p250, %p251
      %p253 = scmp.ne.s32.totalorder %s245, %s248
      %p254 = scmp.eq.s32.totalorder %s20, 0
      %p255 = por %p253, %p254
      %p256 = scmp.ne.s32.totalorder %s245, %s248
      %p257 = scmp.eq.s32.totalorder %s25, 1
      %p258 = por %p256, %p257
      %p259 = scmp.ne.s32.totalorder %s248, %s249
      %p260 = scmp.eq.s32.totalorder %s25, 0
      %p261 = por %p259, %p260
      %p262 = scmp.ne.s32.totalorder %s248, %s249
      %p263 = scmp.eq.s32.totalorder %s26, 1
      %p264 = por %p262, %p263
      %p266 = scmp.ne.s32.totalorder %s249, %s265
      %p267 = scmp.eq.s32.totalorder %s26, 0
      %p268 = por %p266, %p267
      %p269 = scmp.le.s32.totalorder 1, %s20
      %p270 = scmp.lt.s32.totalorder %s20, 3
      %p271 = pnand %p269, %p270
      %p272 = pneg %p271
      // Predicated region
      $region9: #{tpu_custom_call.1} parent=5 // pred_check
        _
      $region10: #{tpu_custom_call.1} parent=5 // pred_check_branch
        %274 = sbr.rel (%p271) target = $region12
      $region11: #{tpu_custom_call.1} parent=5 // pred_region
        %s275 = ssub.s32 %s20, 1
        // Predicated region
        $region13: #{tpu_custom_call.1} parent=11 // pred_check
          %p276 = pneg %p107
        $region14: #{tpu_custom_call.1} parent=11 // pred_check_branch
          %278 = sbr.rel (%p276) target = $region16
        $region15: #{tpu_custom_call.1} parent=11 // pred_region
          _
        $region16: #{tpu_custom_call.1} parent=11 // pred_fallthru
          _
        // Predicated region
        $region17: #{tpu_custom_call.1} parent=11 // pred_check
          %p279 = pneg %p128
        $region18: #{tpu_custom_call.1} parent=11 // pred_check_branch
          %281 = sbr.rel (%p279) target = $region20
        $region19: #{tpu_custom_call.1} parent=11 // pred_region
          %283 = vsyncadd [#allocation3], 0
          %s284 = sshll.u32 %s3, 4
          %s285 = int_to_ptr.hbm [resolvable:$true] %s284
          %s286 = sshll.u32 [#allocation2], 4
          %s287 = int_to_ptr.vmem [resolvable:$true] %s286
          %292 = dma.hbm_to_vmem [thread:$0]  %s285, 1024, %s287, [#allocation3], 64, 64, 4
        $region20: #{tpu_custom_call.1} parent=11 // pred_fallthru
          _
        // Predicated region
        $region21: #{tpu_custom_call.1} parent=11 // pred_check
          %p293 = pneg %p149
        $region22: #{tpu_custom_call.1} parent=11 // pred_check_branch
          %295 = sbr.rel (%p293) target = $region24
        $region23: #{tpu_custom_call.1} parent=11 // pred_region
          _
        $region24: #{tpu_custom_call.1} parent=11 // pred_fallthru
          _
        // Predicated region
        $region25: #{tpu_custom_call.1} parent=11 // pred_check
          %p296 = pneg %p170
        $region26: #{tpu_custom_call.1} parent=11 // pred_check_branch
          %298 = sbr.rel (%p296) target = $region28
        $region27: #{tpu_custom_call.1} parent=11 // pred_region
          %300 = vsyncadd [#allocation6], 0
          %s301 = sshll.u32 %s5, 4
          %s302 = int_to_ptr.hbm [resolvable:$true] %s301
          %s303 = sshll.u32 [#allocation5], 4
          %s304 = int_to_ptr.vmem [resolvable:$true] %s303
          %309 = dma.hbm_to_vmem [thread:$0]  %s302, 1024, %s304, [#allocation6], 64, 64, 4
        $region28: #{tpu_custom_call.1} parent=11 // pred_fallthru
          _
        // Predicated region
        $region29: #{tpu_custom_call.1} parent=11 // pred_check
          %p310 = pneg %p191
        $region30: #{tpu_custom_call.1} parent=11 // pred_check_branch
          %312 = sbr.rel (%p310) target = $region32
        $region31: #{tpu_custom_call.1} parent=11 // pred_region
          _
        $region32: #{tpu_custom_call.1} parent=11 // pred_fallthru
          _
        // Predicated region
        $region33: #{tpu_custom_call.1} parent=11 // pred_check
          %p313 = pneg %p212
        $region34: #{tpu_custom_call.1} parent=11 // pred_check_branch
          %315 = sbr.rel (%p313) target = $region36
        $region35: #{tpu_custom_call.1} parent=11 // pred_region
          %317 = vsyncadd [#allocation6], 0
          %s318 = sshll.u32 %s7, 4
          %s319 = int_to_ptr.hbm [resolvable:$true] %s318
          %s320 = sshll.u32 [#allocation7], 4
          %s321 = int_to_ptr.vmem [resolvable:$true] %s320
          %326 = dma.hbm_to_vmem [thread:$0]  %s319, 1024, %s321, [#allocation6], 64, 64, 4
        $region36: #{tpu_custom_call.1} parent=11 // pred_fallthru
          _
        // Predicated region
        $region37: #{tpu_custom_call.1} parent=11 // pred_check
          %p327 = pneg %p233
        $region38: #{tpu_custom_call.1} parent=11 // pred_check_branch
          %329 = sbr.rel (%p327) target = $region40
        $region39: #{tpu_custom_call.1} parent=11 // pred_region
          _
        $region40: #{tpu_custom_call.1} parent=11 // pred_fallthru
          _
      $region12: #{tpu_custom_call.1} parent=5 // pred_fallthru
        _
      %p330 = scmp.lt.s32.totalorder %s20, 2
      // Predicated region
      $region41: #{tpu_custom_call.1} parent=5 // pred_check
        %p331 = pneg %p330
      $region42: #{tpu_custom_call.1} parent=5 // pred_check_branch
        %333 = sbr.rel (%p331) target = $region44
      $region43: #{tpu_custom_call.1} parent=5 // pred_region
        // Predicated region
        $region45: #{tpu_custom_call.1} parent=43 // pred_check
          %p334 = pneg %p52
        $region46: #{tpu_custom_call.1} parent=43 // pred_check_branch
          %336 = sbr.rel (%p334) target = $region48
        $region47: #{tpu_custom_call.1} parent=43 // pred_region
          %p337 = scmp.lt.s32.totalorder %s27, 1
          %s338 = scalar_select %p337, %s27, 1
          %s339 = scalar_lea.vmem %s0, %s338
        $region48: #{tpu_custom_call.1} parent=43 // pred_fallthru
          _
        // Predicated region
        $region49: #{tpu_custom_call.1} parent=43 // pred_check
          %p340 = pneg %p80
        $region50: #{tpu_custom_call.1} parent=43 // pred_check_branch
          %342 = sbr.rel (%p340) target = $region52
        $region51: #{tpu_custom_call.1} parent=43 // pred_region
          %p343 = scmp.lt.s32.totalorder %s27, 1
          %s344 = scalar_select %p343, %s27, 1
          %p345 = scmp.lt.s32.totalorder %s28, 0
          %s346 = scalar_select %p345, %s28, 0
          %s347 = sadd.s32 %s346, %s344
          %s348 = smul.addr %s347, 4
          %s349 = scalar_lea.vmem %s1, %s348
        $region52: #{tpu_custom_call.1} parent=43 // pred_fallthru
          _
      $region44: #{tpu_custom_call.1} parent=5 // pred_fallthru
        _
      %p350 = scmp.le.s32.totalorder 1, %s20
      %p351 = scmp.lt.s32.totalorder %s20, 3
      %p352 = pnand %p350, %p351
      %p353 = pneg %p352
      // Predicated region
      $region53: #{tpu_custom_call.1} parent=5 // pred_check
        _
      $region54: #{tpu_custom_call.1} parent=5 // pred_check_branch
        %355 = sbr.rel (%p352) target = $region56
      $region55: #{tpu_custom_call.1} parent=5 // pred_region
        %s356 = ssub.s32 %s20, 1
        // Predicated region
        $region57: #{tpu_custom_call.1} parent=55 // pred_check
          %p357 = pneg %p128
        $region58: #{tpu_custom_call.1} parent=55 // pred_check_branch
          %359 = sbr.rel (%p357) target = $region60
        $region59: #{tpu_custom_call.1} parent=55 // pred_region
          %361 = dma.done [#allocation3], 1024
        $region60: #{tpu_custom_call.1} parent=55 // pred_fallthru
          _
        // Predicated region
        $region61: #{tpu_custom_call.1} parent=55 // pred_check
          %p362 = pneg %p170
        $region62: #{tpu_custom_call.1} parent=55 // pred_check_branch
          %364 = sbr.rel (%p362) target = $region64
        $region63: #{tpu_custom_call.1} parent=55 // pred_region
          %366 = dma.done [#allocation6], 1024
        $region64: #{tpu_custom_call.1} parent=55 // pred_fallthru
          _
        // Predicated region
        $region65: #{tpu_custom_call.1} parent=55 // pred_check
          %p367 = pneg %p212
        $region66: #{tpu_custom_call.1} parent=55 // pred_check_branch
          %369 = sbr.rel (%p367) target = $region68
        $region67: #{tpu_custom_call.1} parent=55 // pred_region
          %371 = dma.done [#allocation6], 1024
        $region68: #{tpu_custom_call.1} parent=55 // pred_fallthru
          _
        %p372 = scmp.lt.s32.totalorder %s29, 1
        %s373 = scalar_select %p372, %s29, 1
        %s374 = scalar_lea.vmem %s0, %s373
        %p375 = pneg %p58
        %p376 = pneg %p55
        %p377 = scmp.lt.s32.totalorder %s29, 1
        %s378 = scalar_select %p377, %s29, 1
        %p379 = scmp.lt.s32.totalorder %s30, 0
        %s380 = scalar_select %p379, %s30, 0
        %s381 = sadd.s32 %s380, %s378
        %s382 = smul.addr %s381, 4
        %s383 = scalar_lea.vmem %s1, %s382
        %p384 = pneg %p86
        %p385 = pneg %p83
        %p386 = pneg %p107
        %p387 = pneg %p104
        %p388 = pneg %p128
        %p389 = pneg %p125
        %p390 = pneg %p149
        %p391 = pneg %p146
        %p392 = pneg %p170
        %p393 = pneg %p167
        %p394 = pneg %p191
        %p395 = pneg %p188
        %p396 = pneg %p212
        %p397 = pneg %p209
        %p398 = pneg %p233
        %p399 = pneg %p230
        %p400 = pneg %p261
        %p401 = pneg %p258
        %s402 = sand.u32 %s248, 1
        %s403 = scalar_lea.sflag [#allocation4], %s402
        %s404 = sand.u32 %s248, 1
        %s405 = smul.addr %s404, 8
        %s406 = scalar_lea.vmem [#allocation8], %s405
        %p407 = scmp.lt.s32.totalorder %s29, 1
        %s408 = scalar_select %p407, %s29, 1
        %s409 = scalar_lea.vmem %s0, %s408
        %p410 = scmp.lt.s32.totalorder %s29, 1
        %s411 = scalar_select %p410, %s29, 1
        %p412 = scmp.lt.s32.totalorder %s30, 0
        %s413 = scalar_select %p412, %s30, 0
        %s414 = sadd.s32 %s413, %s411
        %s415 = smul.addr %s414, 4
        %s416 = scalar_lea.vmem %s1, %s415
        %v418 = vld [vmem:[%s416] sm:$0xf]
        %v419 = vld [vmem:[%s2] sm:$0x1]
        %v420 = vld [vmem:[%s409] sm:$0x1]
        %v422 = vperm.slane %v420, 0
        %vm424 = vcmask 15360
        %v426 = vsel %vm424, %v418, 0
        %vm428 = vcmask 1040384
        %v430 = vsel %vm428, %v419, 0
        %432 = vmatpush.bf16.msra.mxu0 0
        %433 = vmatpush.bf16.msra.mxu0 0
        %434 = vmatpush.bf16.msra.mxu0 0
        %435 = vmatpush.bf16.msra.mxu0 0
        %436 = vmatpush.bf16.msra.mxu0 0
        %437 = vmatpush.bf16.msra.mxu0 0
        %438 = vmatpush.bf16.msra.mxu0 0
        %439 = vmatpush.bf16.msra.mxu0 %v430
        %440 = vmatmul.bf16.gmra.mxu0 %v426
        %v441 = vpop.f32.mrf.mxu0
        %v442 = vadd.f32 %v422, %v441
        %v443 = vpop.f32.mrf.mxu0
        %444 = vdwg.mxu0
        %v445 = vld [vmem:[#allocation2] sm:$0xf]
        %v446 = vld [vmem:[#allocation2 + $0x4] sm:$0xf]
        %v447 = vld [vmem:[#allocation2 + $0x8] sm:$0xf]
        %v448 = vld [vmem:[#allocation2 + $0xc] sm:$0xf]
        %v449 = vld [vmem:[#allocation2 + $0x10] sm:$0xf]
        %v450 = vld [vmem:[#allocation2 + $0x14] sm:$0xf]
        %v451 = vld [vmem:[#allocation2 + $0x18] sm:$0xf]
        %v452 = vld [vmem:[#allocation2 + $0x1c] sm:$0xf]
        %v453 = vld [vmem:[#allocation2 + $0x20] sm:$0xf]
        %v454 = vld [vmem:[#allocation2 + $0x24] sm:$0xf]
        %v455 = vld [vmem:[#allocation2 + $0x28] sm:$0xf]
        %v456 = vld [vmem:[#allocation2 + $0x2c] sm:$0xf]
        %v457 = vld [vmem:[#allocation2 + $0x30] sm:$0xf]
        %v458 = vld [vmem:[#allocation2 + $0x34] sm:$0xf]
        %v459 = vld [vmem:[#allocation2 + $0x38] sm:$0xf]
        %v460 = vld [vmem:[#allocation2 + $0x3c] sm:$0xf]
        %v461 = vld [vmem:[%s4] sm:$0x1]
        %v462 = vmax.f32 %v442, 0.0
        %v463 = vpack.c.bf16 %v462, %v462
        %v465 = vperm.slane %v461, 0
        %v483 = vunpack.c.l.b16 %v445
        %v484 = vunpack.c.l.b16 %v446
        %v485 = vunpack.c.l.b16 %v447
        %v486 = vunpack.c.l.b16 %v448
        %v487 = vunpack.c.l.b16 %v449
        %v488 = vunpack.c.l.b16 %v450
        %v489 = vunpack.c.l.b16 %v451
        %v490 = vunpack.c.l.b16 %v452
        %v491 = vunpack.c.l.b16 %v453
        %v492 = vunpack.c.l.b16 %v454
        %v493 = vunpack.c.l.b16 %v455
        %v494 = vunpack.c.l.b16 %v456
        %v495 = vunpack.c.l.b16 %v457
        %v496 = vunpack.c.l.b16 %v458
        %v497 = vunpack.c.l.b16 %v459
        %v498 = vunpack.c.l.b16 %v460
        %v499 = vpack.c.b16 %v484, %v483
        %v500 = vpack.c.b16 %v486, %v485
        %v501 = vpack.c.b16 %v488, %v487
        %v502 = vpack.c.b16 %v490, %v489
        %v503 = vpack.c.b16 %v492, %v491
        %v504 = vpack.c.b16 %v494, %v493
        %v505 = vpack.c.b16 %v496, %v495
        %v506 = vpack.c.b16 %v498, %v497
        %515 = vmatpush.bf16.msra.mxu0 %v506
        %516 = vmatpush.bf16.msra.mxu0 %v505
        %517 = vmatpush.bf16.msra.mxu0 %v504
        %518 = vmatpush.bf16.msra.mxu0 %v503
        %519 = vmatpush.bf16.msra.mxu0 %v502
        %520 = vmatpush.bf16.msra.mxu0 %v501
        %521 = vmatpush.bf16.msra.mxu0 %v500
        %522 = vmatpush.bf16.msra.mxu0 %v499
        %523 = vmatmul.bf16.gmra.mxu0 %v463
        %v524 = vpop.f32.mrf.mxu0
        %v525 = vadd.f32 %v465, %v524
        %v526 = vpop.f32.mrf.mxu0
        %527 = vdwg.mxu0
        %v528 = vld [vmem:[#allocation5] sm:$0xf]
        %v529 = vld [vmem:[#allocation5 + $0x4] sm:$0xf]
        %v530 = vld [vmem:[#allocation5 + $0x8] sm:$0xf]
        %v531 = vld [vmem:[#allocation5 + $0xc] sm:$0xf]
        %v532 = vld [vmem:[#allocation5 + $0x10] sm:$0xf]
        %v533 = vld [vmem:[#allocation5 + $0x14] sm:$0xf]
        %v534 = vld [vmem:[#allocation5 + $0x18] sm:$0xf]
        %v535 = vld [vmem:[#allocation5 + $0x1c] sm:$0xf]
        %v536 = vld [vmem:[#allocation5 + $0x20] sm:$0xf]
        %v537 = vld [vmem:[#allocation5 + $0x24] sm:$0xf]
        %v538 = vld [vmem:[#allocation5 + $0x28] sm:$0xf]
        %v539 = vld [vmem:[#allocation5 + $0x2c] sm:$0xf]
        %v540 = vld [vmem:[#allocation5 + $0x30] sm:$0xf]
        %v541 = vld [vmem:[#allocation5 + $0x34] sm:$0xf]
        %v542 = vld [vmem:[#allocation5 + $0x38] sm:$0xf]
        %v543 = vld [vmem:[#allocation5 + $0x3c] sm:$0xf]
        %v544 = vld [vmem:[%s6] sm:$0x1]
        %v545 = vmax.f32 %v525, 0.0
        %v546 = vpack.c.bf16 %v545, %v545
        %v548 = vperm.slane %v544, 0
        %v566 = vunpack.c.l.b16 %v528
        %v567 = vunpack.c.l.b16 %v529
        %v568 = vunpack.c.l.b16 %v530
        %v569 = vunpack.c.l.b16 %v531
        %v570 = vunpack.c.l.b16 %v532
        %v571 = vunpack.c.l.b16 %v533
        %v572 = vunpack.c.l.b16 %v534
        %v573 = vunpack.c.l.b16 %v535
        %v574 = vunpack.c.l.b16 %v536
        %v575 = vunpack.c.l.b16 %v537
        %v576 = vunpack.c.l.b16 %v538
        %v577 = vunpack.c.l.b16 %v539
        %v578 = vunpack.c.l.b16 %v540
        %v579 = vunpack.c.l.b16 %v541
        %v580 = vunpack.c.l.b16 %v542
        %v581 = vunpack.c.l.b16 %v543
        %v582 = vpack.c.b16 %v567, %v566
        %v583 = vpack.c.b16 %v569, %v568
        %v584 = vpack.c.b16 %v571, %v570
        %v585 = vpack.c.b16 %v573, %v572
        %v586 = vpack.c.b16 %v575, %v574
        %v587 = vpack.c.b16 %v577, %v576
        %v588 = vpack.c.b16 %v579, %v578
        %v589 = vpack.c.b16 %v581, %v580
        %598 = vmatpush.bf16.msra.mxu0 %v589
        %599 = vmatpush.bf16.msra.mxu0 %v588
        %600 = vmatpush.bf16.msra.mxu0 %v587
        %601 = vmatpush.bf16.msra.mxu0 %v586
        %602 = vmatpush.bf16.msra.mxu0 %v585
        %603 = vmatpush.bf16.msra.mxu0 %v584
        %604 = vmatpush.bf16.msra.mxu0 %v583
        %605 = vmatpush.bf16.msra.mxu0 %v582
        %606 = vmatmul.bf16.gmra.mxu0 %v546
        %v607 = vpop.f32.mrf.mxu0
        %v608 = vadd.f32 %v548, %v607
        %v609 = vpop.f32.mrf.mxu0
        %610 = vdwg.mxu0
        %v611 = vld [vmem:[#allocation7] sm:$0xf]
        %v612 = vld [vmem:[#allocation7 + $0x4] sm:$0xf]
        %v613 = vld [vmem:[#allocation7 + $0x8] sm:$0xf]
        %v614 = vld [vmem:[#allocation7 + $0xc] sm:$0xf]
        %v615 = vld [vmem:[#allocation7 + $0x10] sm:$0xf]
        %v616 = vld [vmem:[#allocation7 + $0x14] sm:$0xf]
        %v617 = vld [vmem:[#allocation7 + $0x18] sm:$0xf]
        %v618 = vld [vmem:[#allocation7 + $0x1c] sm:$0xf]
        %v619 = vld [vmem:[#allocation7 + $0x20] sm:$0xf]
        %v620 = vld [vmem:[#allocation7 + $0x24] sm:$0xf]
        %v621 = vld [vmem:[#allocation7 + $0x28] sm:$0xf]
        %v622 = vld [vmem:[#allocation7 + $0x2c] sm:$0xf]
        %v623 = vld [vmem:[#allocation7 + $0x30] sm:$0xf]
        %v624 = vld [vmem:[#allocation7 + $0x34] sm:$0xf]
        %v625 = vld [vmem:[#allocation7 + $0x38] sm:$0xf]
        %v626 = vld [vmem:[#allocation7 + $0x3c] sm:$0xf]
        %v627 = vld [vmem:[%s8] sm:$0x1]
        %v628 = vmax.f32 %v608, 0.0
        %v629 = vpack.c.bf16 %v628, %v628
        %v631 = vperm.slane %v627, 0
        %v649 = vunpack.c.l.b16 %v611
        %v650 = vunpack.c.l.b16 %v612
        %v651 = vunpack.c.l.b16 %v613
        %v652 = vunpack.c.l.b16 %v614
        %v653 = vunpack.c.l.b16 %v615
        %v654 = vunpack.c.l.b16 %v616
        %v655 = vunpack.c.l.b16 %v617
        %v656 = vunpack.c.l.b16 %v618
        %v657 = vunpack.c.l.b16 %v619
        %v658 = vunpack.c.l.b16 %v620
        %v659 = vunpack.c.l.b16 %v621
        %v660 = vunpack.c.l.b16 %v622
        %v661 = vunpack.c.l.b16 %v623
        %v662 = vunpack.c.l.b16 %v624
        %v663 = vunpack.c.l.b16 %v625
        %v664 = vunpack.c.l.b16 %v626
        %v665 = vpack.c.b16 %v650, %v649
        %v666 = vpack.c.b16 %v652, %v651
        %v667 = vpack.c.b16 %v654, %v653
        %v668 = vpack.c.b16 %v656, %v655
        %v669 = vpack.c.b16 %v658, %v657
        %v670 = vpack.c.b16 %v660, %v659
        %v671 = vpack.c.b16 %v662, %v661
        %v672 = vpack.c.b16 %v664, %v663
        %681 = vmatpush.bf16.msra.mxu0 %v672
        %682 = vmatpush.bf16.msra.mxu0 %v671
        %683 = vmatpush.bf16.msra.mxu0 %v670
        %684 = vmatpush.bf16.msra.mxu0 %v669
        %685 = vmatpush.bf16.msra.mxu0 %v668
        %686 = vmatpush.bf16.msra.mxu0 %v667
        %687 = vmatpush.bf16.msra.mxu0 %v666
        %688 = vmatpush.bf16.msra.mxu0 %v665
        %689 = vmatmul.bf16.gmra.mxu0 %v629
        %v690 = vpop.f32.mrf.mxu0
        %v691 = vadd.f32 %v631, %v690
        %v692 = vpop.f32.mrf.mxu0
        %693 = vdwg.mxu0
        %v694 = vlaneseq
        %v695 = vand.u32 %v694, 127
        %v696 = vmax.f32 %v691, 0.0
        %v697 = vand.u32 2147483647, %v691
        %v698 = vsub.f32 0.0, %v697
        %v699 = vmul.f32 %v698, 1.442695
        %v700 = vpow.pop %v699
        %v701 = vadd.f32 %v700, 1.0
        %v702 = vlog2.pop %v701
        %v703 = vmul.f32 %v702, 0.6931472
        %v704 = vmul.f32 -0.5, %v700
        %v705 = vadd.f32 %v704, 1.0
        %v706 = vmul.f32 %v705, %v700
        %v707 = vand.u32 2147483647, %v700
        %vm708 = vcmp.lt.f32.partialorder %v707, 0.0004427343
        %v709 = vsel %vm708, %v706, %v703
        %v710 = vadd.f32 %v696, %v709
        %v711 = vmul.f32 %v710, 0.9
        %v712 = vadd.f32 %v711, 0.1
        %vm713 = vcmp.ge.s32.totalorder %v695, 2
        %vm714 = vcmp.lt.s32.totalorder %v695, 4
        %vm715 = vmand %vm713, %vm714
        %v716 = vsel %vm715, %v712, %v691
        %717 = vst [vmem:[%s406] sm:$0xff] %v716
        %s718 = sand.u32 %s248, 1
        %s719 = scalar_lea.sflag [#allocation4], %s718
        %s720 = sand.u32 %s248, 1
        %s721 = smul.addr %s720, 8
        %s722 = scalar_lea.vmem [#allocation8], %s721
        // Predicated region
        $region69: #{tpu_custom_call.1} parent=55 // pred_check
          %p723 = pneg %p258
        $region70: #{tpu_custom_call.1} parent=55 // pred_check_branch
          %725 = sbr.rel (%p723) target = $region72
        $region71: #{tpu_custom_call.1} parent=55 // pred_region
          %727 = vsyncadd %s719, 0
          %s728 = sadd.s32 %s30, %s29
          %s729 = smul.addr %s728, 8
          %s730 = scalar_lea.hbm %s9, %s729
          %s732 = sshll.u32 %s722, 4
          %s733 = int_to_ptr.vmem [resolvable:$true] %s732
          %s734 = sshll.u32 %s730, 4
          %s735 = int_to_ptr.hbm [resolvable:$true] %s734
          %737 = dma.vmem_to_hbm [thread:$0]  %s733, 128, %s735, %s719
        $region72: #{tpu_custom_call.1} parent=55 // pred_fallthru
          _
      $region56: #{tpu_custom_call.1} parent=5 // pred_fallthru
        _
      %p738 = scmp.le.s32.totalorder 2, %s20
      // Predicated region
      $region73: #{tpu_custom_call.1} parent=5 // pred_check
        %p739 = pneg %p738
      $region74: #{tpu_custom_call.1} parent=5 // pred_check_branch
        %741 = sbr.rel (%p739) target = $region76
      $region75: #{tpu_custom_call.1} parent=5 // pred_region
        %s742 = ssub.s32 %s20, 2
        // Predicated region
        $region77: #{tpu_custom_call.1} parent=75 // pred_check
          %p743 = pneg %p264
        $region78: #{tpu_custom_call.1} parent=75 // pred_check_branch
          %745 = sbr.rel (%p743) target = $region80
        $region79: #{tpu_custom_call.1} parent=75 // pred_region
          %s746 = sand.u32 %s249, 1
          %s747 = scalar_lea.sflag [#allocation4], %s746
          %s748 = sand.u32 %s249, 1
          %s749 = smul.addr %s748, 8
          %s750 = scalar_lea.vmem [#allocation8], %s749
          %752 = dma.done %s747, 128
        $region80: #{tpu_custom_call.1} parent=75 // pred_fallthru
          _
      $region76: #{tpu_custom_call.1} parent=5 // pred_fallthru
        _
    $region6: #{tpu_custom_call.1} parent=1 // loop_footer
      %s24 = sadd.s32 1, %s20
    $region7: #{tpu_custom_call.1} parent=1 // loop_footer_branch
      %19 = sbr.rel target = $region3
    $region8: #{tpu_custom_call.1} parent=1 // loop_exit
      _
    %753 = vsyncpa [#allocation3], 1
    %s754 = scalar_lea.sflag [#allocation3], 1
    %755 = vsyncpa %s754, 1
    %756 = vsyncpa [#allocation6], 1
    %757 = vsyncpa [#allocation4], 1
    %s758 = scalar_lea.sflag [#allocation4], 1
    %759 = vsyncpa %s758, 1

</llo_original>
